<compile_context>
chip_gen: v6e
topology: v6e:2x2x1
jax: 0.10.0
libtpu: 0.0.40
codegen_flags: <defaults>
</compile_context>

<pallas_src>
import functools

import jax
import jax.numpy as jnp
from jax import lax
from jax.experimental import pallas as pl
from jax.experimental.pallas import tpu as pltpu

EPS = 1e-5  # nn.LayerNorm default eps


def _mhsa_kernel(x_ref, pe_ref, w_ref, vec_ref, o_ref, *, n_head, d_pad, tq):
    # x_ref: (1, C, T)  pe_ref: (C, T)  w_ref: (2*H*dp + H*C, C)
    # vec_ref: (2*H*dp + 5*C, 1)  o_ref: (1, C, tq); T / tq sit on lanes.
    C, T = pe_ref.shape
    H, dp = n_head, d_pad
    Hq = H * dp
    inv_c = 1.0 / C

    # Bias / affine slab layout (rows): [bq | bk | bo | g1 | b1 | g2 | b2]
    bq = vec_ref[pl.ds(0, Hq), :]
    bk = vec_ref[pl.ds(Hq, Hq), :]
    bo = vec_ref[pl.ds(2 * Hq, C), :]
    g1 = vec_ref[pl.ds(2 * Hq + C, C), :]
    b1 = vec_ref[pl.ds(2 * Hq + 2 * C, C), :]
    g2 = vec_ref[pl.ds(2 * Hq + 3 * C, C), :]
    b2 = vec_ref[pl.ds(2 * Hq + 4 * C, C), :]

    def layer_norm(v, g, b):
        # Centered two-pass statistics over channels (axis 0).
        mu = jnp.sum(v, axis=0, keepdims=True) * inv_c
        vc = v - mu
        var = jnp.sum(vc * vc, axis=0, keepdims=True) * inv_c
        return vc * lax.rsqrt(var + EPS) * g + b

    x_all = x_ref[0]                                   # (C, T)
    h_all = layer_norm(x_all, g1, b1) + pe_ref[...]    # LN1 + positional enc.

    if tq == T:
        # Single query tile: one fully fused projection matmul (Q | K | Z).
        x_t, h_t = x_all, h_all
        proj = jnp.dot(w_ref[...], h_all, preferred_element_type=jnp.float32)
        q_all = proj[0:Hq, :] + bq                     # (H*dp, T), scale folded
        k_all = proj[Hq:2 * Hq, :] + bk                # (H*dp, T)
        z_all = proj[2 * Hq:, :]                       # (H*C, T) = (Wo Wv) h
    else:
        # Query-tiled path: K/Z over the full T, Q only over this tile.
        q0 = pl.multiple_of(pl.program_id(1) * tq, tq)
        x_t = x_ref[0, :, pl.ds(q0, tq)]               # (C, tq)
        h_t = layer_norm(x_t, g1, b1) + pe_ref[:, pl.ds(q0, tq)]
        kz = jnp.dot(w_ref[pl.ds(Hq, Hq + H * C), :], h_all,
                     preferred_element_type=jnp.float32)
        k_all = kz[0:Hq, :] + bk
        z_all = kz[Hq:, :]
        q_all = jnp.dot(w_ref[pl.ds(0, Hq), :], h_t,
                        preferred_element_type=jnp.float32) + bq

    # Multi-head attention (padding_mask = None). Static unroll over heads;
    # the strict accumulate-into-y carry keeps per-head live ranges short.
    y = jnp.zeros((C, tq), jnp.float32)
    for h in range(H):
        q_h = q_all[h * dp:(h + 1) * dp, :]            # (dp, tq), pad rows = 0
        k_h = k_all[h * dp:(h + 1) * dp, :]            # (dp, T),  pad rows = 0
        s = lax.dot_general(q_h, k_h, (((0,), (0,)), ((), ())),
                            preferred_element_type=jnp.float32)   # (tq, T)
        m = jnp.max(s, axis=-1, keepdims=True)         # lane-axis reductions
        p = jnp.exp(s - m)
        den = jnp.sum(p, axis=-1, keepdims=True)
        r = pl.reciprocal(den, approx=True)            # EUP slot
        r = r * (2.0 - den * r)                        # one Newton step -> f32 acc.
        p = p * r
        z_h = z_all[h * C:(h + 1) * C, :]              # (C, T)
        y = y + lax.dot_general(z_h, p, (((1,), (1,)), ((), ())),
                                preferred_element_type=jnp.float32)  # (C, tq)
    y = y + bo                                         # out-proj bias (+ folded Wo@bv)

    # Dropout(p=0.1) is identity at inference.
    yn = layer_norm(y, g2, b2)
    o_ref[0] = (yn + x_t).astype(o_ref.dtype)          # residual, native (C, T) layout


def positional_encoding(T, C):
    """PE table matching PositionalEncoding.__init__ (rows = positions)."""
    idx = 1.0 / (10000.0 ** (jnp.arange(0, C, 2, dtype=jnp.float32) / C))
    pos = jnp.arange(T, dtype=jnp.float32).reshape(T, 1)
    pe = jnp.zeros((T, C), jnp.float32)
    pe = pe.at[:, 0::2].set(jnp.sin(pos * idx))
    pe = pe.at[:, 1::2].set(jnp.cos(pos * idx))
    return pe                                          # (T, C)


def mhsa_forward(x, params, n_head, *, q_tile=128):
    """x: (B, C, T) float32 — same layout the PyTorch module consumes."""
    B, C, T = x.shape
    H = n_head
    assert C % H == 0
    assert C % 8 == 0, "channel count must be a multiple of 8 (sublane alignment)"
    d = C // H
    dp = -(-d // 8) * 8                                # pad head dim to sublane multiple
    Hq = H * dp
    scale = float(d) ** -0.5
    f32 = jnp.float32

    # ---- one-time parameter transforms (done in the wrapper, not per step) ----
    wq = params["w_q"].reshape(H, d, C).astype(f32) * scale     # scale folded into Wq
    bq = params["b_q"].reshape(H, d).astype(f32) * scale        # ... and into bq
    wk = params["w_k"].reshape(H, d, C).astype(f32)
    bk = params["b_k"].reshape(H, d).astype(f32)
    wv = params["w_v"].reshape(H, d, C).astype(f32)
    bv = params["b_v"].reshape(H, d).astype(f32)
    wo = params["w_o"].reshape(C, H, d).transpose(1, 0, 2).astype(f32)   # (H, C, d)

    pad_w = lambda w: jnp.pad(w, ((0, 0), (0, dp - d), (0, 0))).reshape(Hq, C)
    pad_b = lambda b: jnp.pad(b, ((0, 0), (0, dp - d))).reshape(Hq, 1)

    m_slab = jnp.einsum("hcd,hdk->hck", wo, wv).reshape(H * C, C)   # M_h = Wo_h @ Wv_h
    w_slab = jnp.concatenate([pad_w(wq), pad_w(wk), m_slab], axis=0)  # (2*Hq + H*C, C)

    bo_fold = params["b_o"].astype(f32) + jnp.einsum("hcd,hd->c", wo, bv)
    col = lambda v: v.reshape(C, 1).astype(f32)
    vec_slab = jnp.concatenate(
        [pad_b(bq), pad_b(bk), col(bo_fold),
         col(params["ln1_g"]), col(params["ln1_b"]),
         col(params["ln2_g"]), col(params["ln2_b"])], axis=0)       # (2*Hq + 5*C, 1)

    pe = positional_encoding(T, C).T                                # (C, T)

    # Query tiling: multiple grid steps per core at larger T, (TQ, T) score tile.
    tq = q_tile if (T % q_tile == 0 and T > q_tile) else T
    nq = T // tq

    kernel = functools.partial(_mhsa_kernel, n_head=H, d_pad=dp, tq=tq)

    return pl.pallas_call(
        kernel,
        out_shape=jax.ShapeDtypeStruct((B, C, T), x.dtype),
        grid_spec=pltpu.PrefetchScalarGridSpec(
            num_scalar_prefetch=0,
            grid=(B, nq),
            in_specs=[
                pl.BlockSpec((1, C, T), lambda b, q: (b, 0, 0)),    # x (full T per sample)
                pl.BlockSpec(pe.shape, lambda b, q: (0, 0)),        # PE table (resident)
                pl.BlockSpec(w_slab.shape, lambda b, q: (0, 0)),    # fused weight slab
                pl.BlockSpec(vec_slab.shape, lambda b, q: (0, 0)),  # bias/affine slab
            ],
            out_specs=pl.BlockSpec((1, C, tq), lambda b, q: (b, 0, q)),
        ),
        compiler_params=pltpu.CompilerParams(
            dimension_semantics=("parallel", "parallel"),
            vmem_limit_bytes=32 * 1024 * 1024),
    )(x.astype(f32), pe, w_slab, vec_slab)


def reference(x, params, n_head):
    """Pure-JAX mirror of the PyTorch module (inference, no padding mask)."""
    B, C, T = x.shape
    d = C // n_head
    h = jnp.transpose(x, (0, 2, 1))                    # (B, T, C)

    def ln(v, g, b):
        mu = jnp.mean(v, axis=-1, keepdims=True)
        var = jnp.mean((v - mu) ** 2, axis=-1, keepdims=True)
        return (v - mu) / jnp.sqrt(var + EPS) * g + b

    h = ln(h, params["ln1_g"], params["ln1_b"])
    h = h + positional_encoding(T, C)[None]

    q = h @ params["w_q"].T + params["b_q"]
    k = h @ params["w_k"].T + params["b_k"]
    v = h @ params["w_v"].T + params["b_v"]
    split = lambda z: z.reshape(B, T, n_head, d).transpose(0, 2, 1, 3)
    qh, kh, vh = split(q), split(k), split(v)
    s = jnp.einsum("bhqe,bhke->bhqk", qh, kh) / jnp.sqrt(jnp.float32(d))
    p = jax.nn.softmax(s, axis=-1)
    o = jnp.einsum("bhqk,bhke->bhqe", p, vh)
    o = o.transpose(0, 2, 1, 3).reshape(B, T, C)
    o = o @ params["w_o"].T + params["b_o"]

    o = ln(o, params["ln2_g"], params["ln2_b"])        # dropouts are identity
    return jnp.transpose(o, (0, 2, 1)) + x


if __name__ == "__main__":
    B, C, T = 2, 16, 128       # input_size = 16, seq length 128
    n_head = 4                 # head_dim = 4

    key = jax.random.PRNGKey(0)
    ks = jax.random.split(key, 14)
    sc = 1.0 / (C ** 0.5)
    params = {
        "ln1_g": 1.0 + 0.1 * jax.random.normal(ks[0], (C,), jnp.float32),
        "ln1_b": 0.1 * jax.random.normal(ks[1], (C,), jnp.float32),
        "w_q": sc * jax.random.normal(ks[2], (C, C), jnp.float32),
        "b_q": 0.1 * jax.random.normal(ks[3], (C,), jnp.float32),
        "w_k": sc * jax.random.normal(ks[4], (C, C), jnp.float32),
        "b_k": 0.1 * jax.random.normal(ks[5], (C,), jnp.float32),
        "w_v": sc * jax.random.normal(ks[6], (C, C), jnp.float32),
        "b_v": 0.1 * jax.random.normal(ks[7], (C,), jnp.float32),
        "w_o": sc * jax.random.normal(ks[8], (C, C), jnp.float32),
        "b_o": 0.1 * jax.random.normal(ks[9], (C,), jnp.float32),
        "ln2_g": 1.0 + 0.1 * jax.random.normal(ks[10], (C,), jnp.float32),
        "ln2_b": 0.1 * jax.random.normal(ks[11], (C,), jnp.float32),
    }

    # Test 1: single query tile (fully fused projection path).
    x = jax.random.normal(ks[12], (B, C, T), jnp.float32)
    out = jax.block_until_ready(mhsa_forward(x, params, n_head))
    ref = jax.block_until_ready(reference(x, params, n_head))
    assert out.shape == (B, C, T)
    err = float(jnp.max(jnp.abs(out - ref)))
    assert jnp.allclose(out, ref, atol=3e-4, rtol=3e-4), f"max abs err {err}"

    # Test 2: query-tiled path (grid = (B, T // 128)), exercises the v7x-friendly tiling.
    T2 = 256
    x2 = jax.random.normal(ks[13], (1, C, T2), jnp.float32)
    out2 = jax.block_until_ready(mhsa_forward(x2, params, n_head))
    ref2 = jax.block_until_ready(reference(x2, params, n_head))
    err2 = float(jnp.max(jnp.abs(out2 - ref2)))
    assert jnp.allclose(out2, ref2, atol=3e-4, rtol=3e-4), f"max abs err {err2}"

    print("KERNEL_OK")
</pallas_src>

<mosaic_0001>
module attributes {stable_mosaic.version = 11 : i64} {
  func.func @_mhsa_kernel(%arg0: i32, %arg1: i32, %arg2: memref<1x16x128xf32, #tpu.memory_space<vmem>>, %arg3: memref<16x128xf32, #tpu.memory_space<vmem>>, %arg4: memref<128x16xf32, #tpu.memory_space<vmem>>, %arg5: memref<144x1xf32, #tpu.memory_space<vmem>>, %arg6: memref<1x16x128xf32, #tpu.memory_space<vmem>>) attributes {dimension_semantics = [#tpu.dimension_semantics<parallel>, #tpu.dimension_semantics<parallel>], iteration_bounds = array<i64: 2, 1>, scalar_prefetch = 0 : i64, scratch_operands = 0 : i64, tpu.core_type = #tpu.core_type<tc>, window_params = [{transform_indices = @transform_0, window_bounds = array<i64: 1, 16, 128>}, {pipeline_mode = #tpu.pipeline_mode<synchronous>, transform_indices = @transform_1, window_bounds = array<i64: 16, 128>}, {pipeline_mode = #tpu.pipeline_mode<synchronous>, transform_indices = @transform_2, window_bounds = array<i64: 128, 16>}, {pipeline_mode = #tpu.pipeline_mode<synchronous>, transform_indices = @transform_3, window_bounds = array<i64: 144, 1>}, {transform_indices = @transform_4, window_bounds = array<i64: 1, 16, 128>}]} {
    %c0 = arith.constant 0 : index
    %c0_0 = arith.constant 0 : index
    %0 = vector.load %arg5[%c0, %c0_0] : memref<144x1xf32, #tpu.memory_space<vmem>>, vector<32x1xf32>
    %c32 = arith.constant 32 : index
    %c0_1 = arith.constant 0 : index
    %1 = vector.load %arg5[%c32, %c0_1] : memref<144x1xf32, #tpu.memory_space<vmem>>, vector<32x1xf32>
    %c64 = arith.constant 64 : index
    %c0_2 = arith.constant 0 : index
    %2 = vector.load %arg5[%c64, %c0_2] : memref<144x1xf32, #tpu.memory_space<vmem>>, vector<16x1xf32>
    %c80 = arith.constant 80 : index
    %c0_3 = arith.constant 0 : index
    %3 = vector.load %arg5[%c80, %c0_3] : memref<144x1xf32, #tpu.memory_space<vmem>>, vector<16x1xf32>
    %c96 = arith.constant 96 : index
    %c0_4 = arith.constant 0 : index
    %4 = vector.load %arg5[%c96, %c0_4] : memref<144x1xf32, #tpu.memory_space<vmem>>, vector<16x1xf32>
    %c112 = arith.constant 112 : index
    %c0_5 = arith.constant 0 : index
    %5 = vector.load %arg5[%c112, %c0_5] : memref<144x1xf32, #tpu.memory_space<vmem>>, vector<16x1xf32>
    %c128 = arith.constant 128 : index
    %c0_6 = arith.constant 0 : index
    %6 = vector.load %arg5[%c128, %c0_6] : memref<144x1xf32, #tpu.memory_space<vmem>>, vector<16x1xf32>
    %c0_7 = arith.constant 0 : index
    %c0_8 = arith.constant 0 : index
    %c0_9 = arith.constant 0 : index
    %7 = vector.load %arg2[%c0_7, %c0_8, %c0_9] : memref<1x16x128xf32, #tpu.memory_space<vmem>>, vector<1x16x128xf32>
    %8 = vector.shape_cast %7 : vector<1x16x128xf32> to vector<16x128xf32>
    %cst = arith.constant dense<0.000000e+00> : vector<128xf32>
    %9 = vector.multi_reduction <add>, %8, %cst [0] : vector<16x128xf32> to vector<128xf32>
    %10 = vector.shape_cast %9 : vector<128xf32> to vector<1x128xf32>
    %cst_10 = arith.constant 6.250000e-02 : f32
    %11 = vector.broadcast %cst_10 : f32 to vector<1x128xf32>
    %12 = arith.mulf %10, %11 : vector<1x128xf32>
    %13 = vector.broadcast %12 : vector<1x128xf32> to vector<16x128xf32>
    %14 = arith.subf %8, %13 : vector<16x128xf32>
    %15 = arith.mulf %14, %14 : vector<16x128xf32>
    %cst_11 = arith.constant dense<0.000000e+00> : vector<128xf32>
    %16 = vector.multi_reduction <add>, %15, %cst_11 [0] : vector<16x128xf32> to vector<128xf32>
    %17 = vector.shape_cast %16 : vector<128xf32> to vector<1x128xf32>
    %cst_12 = arith.constant 6.250000e-02 : f32
    %18 = vector.broadcast %cst_12 : f32 to vector<1x128xf32>
    %19 = arith.mulf %17, %18 : vector<1x128xf32>
    %cst_13 = arith.constant 9.99999974E-6 : f32
    %20 = vector.broadcast %cst_13 : f32 to vector<1x128xf32>
    %21 = arith.addf %19, %20 : vector<1x128xf32>
    %22 = math.rsqrt %21 : vector<1x128xf32>
    %23 = vector.broadcast %22 : vector<1x128xf32> to vector<16x128xf32>
    %24 = arith.mulf %14, %23 : vector<16x128xf32>
    %25 = vector.broadcast %3 : vector<16x1xf32> to vector<16x128xf32>
    %26 = arith.mulf %24, %25 : vector<16x128xf32>
    %27 = vector.broadcast %4 : vector<16x1xf32> to vector<16x128xf32>
    %28 = arith.addf %26, %27 : vector<16x128xf32>
    %c0_14 = arith.constant 0 : index
    %c0_15 = arith.constant 0 : index
    %29 = vector.load %arg3[%c0_14, %c0_15] : memref<16x128xf32, #tpu.memory_space<vmem>>, vector<16x128xf32>
    %30 = arith.addf %28, %29 : vector<16x128xf32>
    %c0_16 = arith.constant 0 : index
    %c0_17 = arith.constant 0 : index
    %31 = vector.load %arg4[%c0_16, %c0_17] : memref<128x16xf32, #tpu.memory_space<vmem>>, vector<128x16xf32>
    %cst_18 = arith.constant dense<0.000000e+00> : vector<128x128xf32>
    %32 = tpu.matmul %31, %30, %cst_18 {dimension_numbers = #tpu.dot_dimension_numbers<[1], [0], [0], [1], [0, 0, 1, 1], [], []>} : vector<128x16xf32>, vector<16x128xf32>, vector<128x128xf32> -> vector<128x128xf32>
    %33 = vector.extract_strided_slice %32 {offsets = [0, 0], sizes = [32, 128], strides = [1, 1]} : vector<128x128xf32> to vector<32x128xf32>
    %34 = vector.broadcast %0 : vector<32x1xf32> to vector<32x128xf32>
    %35 = arith.addf %33, %34 : vector<32x128xf32>
    %36 = vector.extract_strided_slice %32 {offsets = [32, 0], sizes = [32, 128], strides = [1, 1]} : vector<128x128xf32> to vector<32x128xf32>
    %37 = vector.broadcast %1 : vector<32x1xf32> to vector<32x128xf32>
    %38 = arith.addf %36, %37 : vector<32x128xf32>
    %39 = vector.extract_strided_slice %32 {offsets = [64, 0], sizes = [64, 128], strides = [1, 1]} : vector<128x128xf32> to vector<64x128xf32>
    %cst_19 = arith.constant 0.000000e+00 : f32
    %40 = vector.broadcast %cst_19 : f32 to vector<16x128xf32>
    %41 = vector.extract_strided_slice %35 {offsets = [0, 0], sizes = [8, 128], strides = [1, 1]} : vector<32x128xf32> to vector<8x128xf32>
    %42 = vector.extract_strided_slice %38 {offsets = [0, 0], sizes = [8, 128], strides = [1, 1]} : vector<32x128xf32> to vector<8x128xf32>
    %cst_20 = arith.constant dense<0.000000e+00> : vector<128x128xf32>
    %43 = tpu.matmul %41, %42, %cst_20 {dimension_numbers = #tpu.dot_dimension_numbers<[0], [0], [1], [1], [0, 1, 1, 1], [], []>} : vector<8x128xf32>, vector<8x128xf32>, vector<128x128xf32> -> vector<128x128xf32>
    %cst_21 = arith.constant dense<0xFF800000> : vector<128xf32>
    %44 = vector.multi_reduction <maximumf>, %43, %cst_21 [1] : vector<128x128xf32> to vector<128xf32>
    %45 = vector.shape_cast %44 : vector<128xf32> to vector<128x1xf32>
    %46 = vector.broadcast %45 : vector<128x1xf32> to vector<128x128xf32>
    %47 = arith.subf %43, %46 : vector<128x128xf32>
    %48 = math.exp %47 : vector<128x128xf32>
    %cst_22 = arith.constant dense<0.000000e+00> : vector<128xf32>
    %49 = vector.multi_reduction <add>, %48, %cst_22 [1] : vector<128x128xf32> to vector<128xf32>
    %50 = vector.shape_cast %49 : vector<128xf32> to vector<128x1xf32>
    %51 = tpu.reciprocal %50 {approx = true} : vector<128x1xf32> -> vector<128x1xf32>
    %52 = arith.mulf %50, %51 : vector<128x1xf32>
    %cst_23 = arith.constant 2.000000e+00 : f32
    %53 = vector.broadcast %cst_23 : f32 to vector<128x1xf32>
    %54 = arith.subf %53, %52 : vector<128x1xf32>
    %55 = arith.mulf %51, %54 : vector<128x1xf32>
    %56 = vector.broadcast %55 : vector<128x1xf32> to vector<128x128xf32>
    %57 = arith.mulf %48, %56 : vector<128x128xf32>
    %58 = vector.extract_strided_slice %39 {offsets = [0, 0], sizes = [16, 128], strides = [1, 1]} : vector<64x128xf32> to vector<16x128xf32>
    %cst_24 = arith.constant dense<0.000000e+00> : vector<16x128xf32>
    %59 = tpu.matmul %58, %57, %cst_24 {dimension_numbers = #tpu.dot_dimension_numbers<[1], [1], [0], [0], [0, 0, 1, 0], [], []>} : vector<16x128xf32>, vector<128x128xf32>, vector<16x128xf32> -> vector<16x128xf32>
    %60 = arith.addf %40, %59 : vector<16x128xf32>
    %61 = vector.extract_strided_slice %35 {offsets = [8, 0], sizes = [8, 128], strides = [1, 1]} : vector<32x128xf32> to vector<8x128xf32>
    %62 = vector.extract_strided_slice %38 {offsets = [8, 0], sizes = [8, 128], strides = [1, 1]} : vector<32x128xf32> to vector<8x128xf32>
    %cst_25 = arith.constant dense<0.000000e+00> : vector<128x128xf32>
    %63 = tpu.matmul %61, %62, %cst_25 {dimension_numbers = #tpu.dot_dimension_numbers<[0], [0], [1], [1], [0, 1, 1, 1], [], []>} : vector<8x128xf32>, vector<8x128xf32>, vector<128x128xf32> -> vector<128x128xf32>
    %cst_26 = arith.constant dense<0xFF800000> : vector<128xf32>
    %64 = vector.multi_reduction <maximumf>, %63, %cst_26 [1] : vector<128x128xf32> to vector<128xf32>
    %65 = vector.shape_cast %64 : vector<128xf32> to vector<128x1xf32>
    %66 = vector.broadcast %65 : vector<128x1xf32> to vector<128x128xf32>
    %67 = arith.subf %63, %66 : vector<128x128xf32>
    %68 = math.exp %67 : vector<128x128xf32>
    %cst_27 = arith.constant dense<0.000000e+00> : vector<128xf32>
    %69 = vector.multi_reduction <add>, %68, %cst_27 [1] : vector<128x128xf32> to vector<128xf32>
    %70 = vector.shape_cast %69 : vector<128xf32> to vector<128x1xf32>
    %71 = tpu.reciprocal %70 {approx = true} : vector<128x1xf32> -> vector<128x1xf32>
    %72 = arith.mulf %70, %71 : vector<128x1xf32>
    %cst_28 = arith.constant 2.000000e+00 : f32
    %73 = vector.broadcast %cst_28 : f32 to vector<128x1xf32>
    %74 = arith.subf %73, %72 : vector<128x1xf32>
    %75 = arith.mulf %71, %74 : vector<128x1xf32>
    %76 = vector.broadcast %75 : vector<128x1xf32> to vector<128x128xf32>
    %77 = arith.mulf %68, %76 : vector<128x128xf32>
    %78 = vector.extract_strided_slice %39 {offsets = [16, 0], sizes = [16, 128], strides = [1, 1]} : vector<64x128xf32> to vector<16x128xf32>
    %cst_29 = arith.constant dense<0.000000e+00> : vector<16x128xf32>
    %79 = tpu.matmul %78, %77, %cst_29 {dimension_numbers = #tpu.dot_dimension_numbers<[1], [1], [0], [0], [0, 0, 1, 0], [], []>} : vector<16x128xf32>, vector<128x128xf32>, vector<16x128xf32> -> vector<16x128xf32>
    %80 = arith.addf %60, %79 : vector<16x128xf32>
    %81 = vector.extract_strided_slice %35 {offsets = [16, 0], sizes = [8, 128], strides = [1, 1]} : vector<32x128xf32> to vector<8x128xf32>
    %82 = vector.extract_strided_slice %38 {offsets = [16, 0], sizes = [8, 128], strides = [1, 1]} : vector<32x128xf32> to vector<8x128xf32>
    %cst_30 = arith.constant dense<0.000000e+00> : vector<128x128xf32>
    %83 = tpu.matmul %81, %82, %cst_30 {dimension_numbers = #tpu.dot_dimension_numbers<[0], [0], [1], [1], [0, 1, 1, 1], [], []>} : vector<8x128xf32>, vector<8x128xf32>, vector<128x128xf32> -> vector<128x128xf32>
    %cst_31 = arith.constant dense<0xFF800000> : vector<128xf32>
    %84 = vector.multi_reduction <maximumf>, %83, %cst_31 [1] : vector<128x128xf32> to vector<128xf32>
    %85 = vector.shape_cast %84 : vector<128xf32> to vector<128x1xf32>
    %86 = vector.broadcast %85 : vector<128x1xf32> to vector<128x128xf32>
    %87 = arith.subf %83, %86 : vector<128x128xf32>
    %88 = math.exp %87 : vector<128x128xf32>
    %cst_32 = arith.constant dense<0.000000e+00> : vector<128xf32>
    %89 = vector.multi_reduction <add>, %88, %cst_32 [1] : vector<128x128xf32> to vector<128xf32>
    %90 = vector.shape_cast %89 : vector<128xf32> to vector<128x1xf32>
    %91 = tpu.reciprocal %90 {approx = true} : vector<128x1xf32> -> vector<128x1xf32>
    %92 = arith.mulf %90, %91 : vector<128x1xf32>
    %cst_33 = arith.constant 2.000000e+00 : f32
    %93 = vector.broadcast %cst_33 : f32 to vector<128x1xf32>
    %94 = arith.subf %93, %92 : vector<128x1xf32>
    %95 = arith.mulf %91, %94 : vector<128x1xf32>
    %96 = vector.broadcast %95 : vector<128x1xf32> to vector<128x128xf32>
    %97 = arith.mulf %88, %96 : vector<128x128xf32>
    %98 = vector.extract_strided_slice %39 {offsets = [32, 0], sizes = [16, 128], strides = [1, 1]} : vector<64x128xf32> to vector<16x128xf32>
    %cst_34 = arith.constant dense<0.000000e+00> : vector<16x128xf32>
    %99 = tpu.matmul %98, %97, %cst_34 {dimension_numbers = #tpu.dot_dimension_numbers<[1], [1], [0], [0], [0, 0, 1, 0], [], []>} : vector<16x128xf32>, vector<128x128xf32>, vector<16x128xf32> -> vector<16x128xf32>
    %100 = arith.addf %80, %99 : vector<16x128xf32>
    %101 = vector.extract_strided_slice %35 {offsets = [24, 0], sizes = [8, 128], strides = [1, 1]} : vector<32x128xf32> to vector<8x128xf32>
    %102 = vector.extract_strided_slice %38 {offsets = [24, 0], sizes = [8, 128], strides = [1, 1]} : vector<32x128xf32> to vector<8x128xf32>
    %cst_35 = arith.constant dense<0.000000e+00> : vector<128x128xf32>
    %103 = tpu.matmul %101, %102, %cst_35 {dimension_numbers = #tpu.dot_dimension_numbers<[0], [0], [1], [1], [0, 1, 1, 1], [], []>} : vector<8x128xf32>, vector<8x128xf32>, vector<128x128xf32> -> vector<128x128xf32>
    %cst_36 = arith.constant dense<0xFF800000> : vector<128xf32>
    %104 = vector.multi_reduction <maximumf>, %103, %cst_36 [1] : vector<128x128xf32> to vector<128xf32>
    %105 = vector.shape_cast %104 : vector<128xf32> to vector<128x1xf32>
    %106 = vector.broadcast %105 : vector<128x1xf32> to vector<128x128xf32>
    %107 = arith.subf %103, %106 : vector<128x128xf32>
    %108 = math.exp %107 : vector<128x128xf32>
    %cst_37 = arith.constant dense<0.000000e+00> : vector<128xf32>
    %109 = vector.multi_reduction <add>, %108, %cst_37 [1] : vector<128x128xf32> to vector<128xf32>
    %110 = vector.shape_cast %109 : vector<128xf32> to vector<128x1xf32>
    %111 = tpu.reciprocal %110 {approx = true} : vector<128x1xf32> -> vector<128x1xf32>
    %112 = arith.mulf %110, %111 : vector<128x1xf32>
    %cst_38 = arith.constant 2.000000e+00 : f32
    %113 = vector.broadcast %cst_38 : f32 to vector<128x1xf32>
    %114 = arith.subf %113, %112 : vector<128x1xf32>
    %115 = arith.mulf %111, %114 : vector<128x1xf32>
    %116 = vector.broadcast %115 : vector<128x1xf32> to vector<128x128xf32>
    %117 = arith.mulf %108, %116 : vector<128x128xf32>
    %118 = vector.extract_strided_slice %39 {offsets = [48, 0], sizes = [16, 128], strides = [1, 1]} : vector<64x128xf32> to vector<16x128xf32>
    %cst_39 = arith.constant dense<0.000000e+00> : vector<16x128xf32>
    %119 = tpu.matmul %118, %117, %cst_39 {dimension_numbers = #tpu.dot_dimension_numbers<[1], [1], [0], [0], [0, 0, 1, 0], [], []>} : vector<16x128xf32>, vector<128x128xf32>, vector<16x128xf32> -> vector<16x128xf32>
    %120 = arith.addf %100, %119 : vector<16x128xf32>
    %121 = vector.broadcast %2 : vector<16x1xf32> to vector<16x128xf32>
    %122 = arith.addf %120, %121 : vector<16x128xf32>
    %cst_40 = arith.constant dense<0.000000e+00> : vector<128xf32>
    %123 = vector.multi_reduction <add>, %122, %cst_40 [0] : vector<16x128xf32> to vector<128xf32>
    %124 = vector.shape_cast %123 : vector<128xf32> to vector<1x128xf32>
    %cst_41 = arith.constant 6.250000e-02 : f32
    %125 = vector.broadcast %cst_41 : f32 to vector<1x128xf32>
    %126 = arith.mulf %124, %125 : vector<1x128xf32>
    %127 = vector.broadcast %126 : vector<1x128xf32> to vector<16x128xf32>
    %128 = arith.subf %122, %127 : vector<16x128xf32>
    %129 = arith.mulf %128, %128 : vector<16x128xf32>
    %cst_42 = arith.constant dense<0.000000e+00> : vector<128xf32>
    %130 = vector.multi_reduction <add>, %129, %cst_42 [0] : vector<16x128xf32> to vector<128xf32>
    %131 = vector.shape_cast %130 : vector<128xf32> to vector<1x128xf32>
    %cst_43 = arith.constant 6.250000e-02 : f32
    %132 = vector.broadcast %cst_43 : f32 to vector<1x128xf32>
    %133 = arith.mulf %131, %132 : vector<1x128xf32>
    %cst_44 = arith.constant 9.99999974E-6 : f32
    %134 = vector.broadcast %cst_44 : f32 to vector<1x128xf32>
    %135 = arith.addf %133, %134 : vector<1x128xf32>
    %136 = math.rsqrt %135 : vector<1x128xf32>
    %137 = vector.broadcast %136 : vector<1x128xf32> to vector<16x128xf32>
    %138 = arith.mulf %128, %137 : vector<16x128xf32>
    %139 = vector.broadcast %5 : vector<16x1xf32> to vector<16x128xf32>
    %140 = arith.mulf %138, %139 : vector<16x128xf32>
    %141 = vector.broadcast %6 : vector<16x1xf32> to vector<16x128xf32>
    %142 = arith.addf %140, %141 : vector<16x128xf32>
    %143 = arith.addf %142, %8 : vector<16x128xf32>
    %c0_45 = arith.constant 0 : index
    %c0_46 = arith.constant 0 : index
    %c0_47 = arith.constant 0 : index
    %144 = vector.load %arg6[%c0_45, %c0_46, %c0_47] : memref<1x16x128xf32, #tpu.memory_space<vmem>>, vector<1x16x128xf32>
    %145 = vector.shape_cast %144 : vector<1x16x128xf32> to vector<16x128xf32>
    %146 = vector.shape_cast %143 : vector<16x128xf32> to vector<1x16x128xf32>
    tpu.vector_store %arg6[%c0_45, %c0_46, %c0_47], %146 {strides = array<i32>} : memref<1x16x128xf32, #tpu.memory_space<vmem>>, vector<1x16x128xf32>,
    return
  }
  func.func @transform_0(%arg0: i32, %arg1: i32) -> (i32, i32, i32) {
    %c0_i32 = arith.constant 0 : i32
    %c0_i32_0 = arith.constant 0 : i32
    %c0_i32_1 = arith.constant 0 : i32
    return %arg0, %c0_i32, %c0_i32_0 : i32, i32, i32
  }
  func.func @transform_1(%arg0: i32, %arg1: i32) -> (i32, i32) {
    %c0_i32 = arith.constant 0 : i32
    %c0_i32_0 = arith.constant 0 : i32
    %c0_i32_1 = arith.constant 0 : i32
    return %c0_i32, %c0_i32_0 : i32, i32
  }
  func.func @transform_2(%arg0: i32, %arg1: i32) -> (i32, i32) {
    %c0_i32 = arith.constant 0 : i32
    %c0_i32_0 = arith.constant 0 : i32
    %c0_i32_1 = arith.constant 0 : i32
    return %c0_i32, %c0_i32_0 : i32, i32
  }
  func.func @transform_3(%arg0: i32, %arg1: i32) -> (i32, i32) {
    %c0_i32 = arith.constant 0 : i32
    %c0_i32_0 = arith.constant 0 : i32
    %c0_i32_1 = arith.constant 0 : i32
    return %c0_i32, %c0_i32_0 : i32, i32
  }
  func.func @transform_4(%arg0: i32, %arg1: i32) -> (i32, i32, i32) {
    %c0_i32 = arith.constant 0 : i32
    %c0_i32_0 = arith.constant 0 : i32
    return %arg0, %c0_i32, %arg1 : i32, i32, i32
  }
}

</mosaic_0001>

<llo_original>
// kernel: tpu_custom_call.1
$region0: #{tpu_custom_call.1}
  #allocation0 [shape = 'u32[]', space=smem, size = 0x4, offset = 0x4, fixed_abs, tag = 'smem constant byte address 0x4 - core index']
  #allocation1 [shape = 'u32[144,128]{1,0:T(1,128)}', space=vmem, size = 0x12000, scoped, tag = 'internal scratch']
  %s0 = inlined_call_operand.vmem [shape: f32[2,16,128], index: 0, kind: input, shape index: {}]
  %s1 = inlined_call_operand.vmem [shape: f32[16,128], index: 1, kind: input, shape index: {}]
  %s2 = inlined_call_operand.vmem [shape: f32[128,16], index: 2, kind: input, shape index: {}]
  %s3 = inlined_call_operand.vmem [shape: f32[144,1], index: 3, kind: input, shape index: {}]
  %s4 = inlined_call_operand.hbm [shape: f32[2,16,128], index: 4, kind: output, shape index: {}]
  %s5 = sld [smem:[#allocation0]]
  $region49: #{tpu_custom_call.1} parent=0
    _
  %s7 = ssub.s32 1, %s5
  %s8 = scalar_select 0, %s7, %s5
  $region1: #{tpu_custom_call.1} parent=0
    #allocation2 [shape = 'u8[16384]{0}', space=vmem, size = 0x4000, scoped, tag = 'output window, operand 0']
    #allocation3 [shape = 's32[2]{0}', space=sflag, size = 0x8, scoped, tag = 'scoped memory for tpu_custom_call.1']
    %9 = vsyncpa [#allocation3], 0
    %s10 = scalar_lea.sflag [#allocation3], 1
    %11 = vsyncpa %s10, 0
    loop: start=0, step=1, limit=4
    $region2: #{tpu_custom_call.1} parent=1 // loop_pre_header
      _
    $region3: #{tpu_custom_call.1} parent=1 // loop_header
      %s13 = sphi 0, %s17
      %p14 = scmp.ge.s32.totalorder %s13, 4
      %s20 = sphi 0, %s32
      %s21 = sphi 0, %s28
      %s22 = sphi 0, %s20
      %s23 = sphi 0, %s21
      %s24 = sphi 0, %s22
      %s25 = sphi 0, %s23
      %s35 = sphi 0, %s37
      %s38 = sphi 0, %s35
      %s39 = sphi 0, %s38
      %s55 = sphi 0, %s39
      %s59 = sphi 0, %s59
      %s61 = sphi 0, %s59
      %s62 = sphi 0, %s61
      %s76 = sphi 0, %s62
      %s80 = sphi 0, %s80
      %s82 = sphi 0, %s80
      %s83 = sphi 0, %s82
      %s97 = sphi 0, %s83
      %s101 = sphi 0, %s101
      %s103 = sphi 0, %s101
      %s104 = sphi 0, %s103
      %s118 = sphi 0, %s104
      %s126 = sphi 0, %s128
      %s129 = sphi 0, %s126
      %s130 = sphi 0, %s129
      %s146 = sphi 0, %s130
    $region4: #{tpu_custom_call.1} parent=1 // loop_header_branch
      %16 = sbr.rel (%p14) target = $region8
    $region5: #{tpu_custom_call.1} parent=1 // loop_body
      %s18 = ssub.s32 %s13, 1
      %s19 = ssub.s32 %s13, 2
      %s26 = sadd.s32 1, %s21
      %p27 = scmp.ge.s32.totalorder %s26, 1
      %s28 = scalar_select %p27, 0, %s26
      %s29 = sadd.s32 1, %s20
      %s30 = scalar_select %p27, %s29, %s20
      %p31 = scmp.ge.s32.totalorder %s30, 2
      %s32 = scalar_select %p31, 0, %s30
      %s33 = ssub.s32 %s20, %s32
      %p34 = scmp.eq.s32.totalorder %s33, 0
      %s36 = sadd.s32 %s35, 1
      %s37 = scalar_select %p34, %s35, %s36
      %p40 = pneg %p34
      %p41 = scmp.eq.s32.totalorder %s13, 1
      %p42 = por %p40, %p41
      %p43 = scmp.ne.s32.totalorder %s35, %s38
      %p44 = scmp.eq.s32.totalorder %s13, 0
      %p45 = por %p43, %p44
      %p46 = scmp.ne.s32.totalorder %s35, %s38
      %p47 = scmp.eq.s32.totalorder %s18, 1
      %p48 = por %p46, %p47
      %p49 = scmp.ne.s32.totalorder %s38, %s39
      %p50 = scmp.eq.s32.totalorder %s18, 0
      %p51 = por %p49, %p50
      %p52 = scmp.ne.s32.totalorder %s38, %s39
      %p53 = scmp.eq.s32.totalorder %s19, 1
      %p54 = por %p52, %p53
      %p56 = scmp.ne.s32.totalorder %s39, %s55
      %p57 = scmp.eq.s32.totalorder %s19, 0
      %p58 = por %p56, %p57
      %s60 = sadd.s32 %s59, 1
      %p63 = scmp.eq.s32.totalorder %s13, 1
      %p64 = scmp.ne.s32.totalorder %s59, %s61
      %p65 = scmp.eq.s32.totalorder %s13, 0
      %p66 = por %p64, %p65
      %p67 = scmp.ne.s32.totalorder %s59, %s61
      %p68 = scmp.eq.s32.totalorder %s18, 1
      %p69 = por %p67, %p68
      %p70 = scmp.ne.s32.totalorder %s61, %s62
      %p71 = scmp.eq.s32.totalorder %s18, 0
      %p72 = por %p70, %p71
      %p73 = scmp.ne.s32.totalorder %s61, %s62
      %p74 = scmp.eq.s32.totalorder %s19, 1
      %p75 = por %p73, %p74
      %p77 = scmp.ne.s32.totalorder %s62, %s76
      %p78 = scmp.eq.s32.totalorder %s19, 0
      %p79 = por %p77, %p78
      %s81 = sadd.s32 %s80, 1
      %p84 = scmp.eq.s32.totalorder %s13, 1
      %p85 = scmp.ne.s32.totalorder %s80, %s82
      %p86 = scmp.eq.s32.totalorder %s13, 0
      %p87 = por %p85, %p86
      %p88 = scmp.ne.s32.totalorder %s80, %s82
      %p89 = scmp.eq.s32.totalorder %s18, 1
      %p90 = por %p88, %p89
      %p91 = scmp.ne.s32.totalorder %s82, %s83
      %p92 = scmp.eq.s32.totalorder %s18, 0
      %p93 = por %p91, %p92
      %p94 = scmp.ne.s32.totalorder %s82, %s83
      %p95 = scmp.eq.s32.totalorder %s19, 1
      %p96 = por %p94, %p95
      %p98 = scmp.ne.s32.totalorder %s83, %s97
      %p99 = scmp.eq.s32.totalorder %s19, 0
      %p100 = por %p98, %p99
      %s102 = sadd.s32 %s101, 1
      %p105 = scmp.eq.s32.totalorder %s13, 1
      %p106 = scmp.ne.s32.totalorder %s101, %s103
      %p107 = scmp.eq.s32.totalorder %s13, 0
      %p108 = por %p106, %p107
      %p109 = scmp.ne.s32.totalorder %s101, %s103
      %p110 = scmp.eq.s32.totalorder %s18, 1
      %p111 = por %p109, %p110
      %p112 = scmp.ne.s32.totalorder %s103, %s104
      %p113 = scmp.eq.s32.totalorder %s18, 0
      %p114 = por %p112, %p113
      %p115 = scmp.ne.s32.totalorder %s103, %s104
      %p116 = scmp.eq.s32.totalorder %s19, 1
      %p117 = por %p115, %p116
      %p119 = scmp.ne.s32.totalorder %s104, %s118
      %p120 = scmp.eq.s32.totalorder %s19, 0
      %p121 = por %p119, %p120
      %s122 = ssub.s32 %s20, %s32
      %s123 = ssub.s32 %s21, %s28
      %s124 = sor.u32 %s122, %s123
      %p125 = scmp.eq.s32.totalorder %s124, 0
      %s127 = sadd.s32 %s126, 1
      %s128 = scalar_select %p125, %s126, %s127
      %p131 = pneg %p125
      %p132 = scmp.eq.s32.totalorder %s13, 1
      %p133 = por %p131, %p132
      %p134 = scmp.ne.s32.totalorder %s126, %s129
      %p135 = scmp.eq.s32.totalorder %s13, 0
      %p136 = por %p134, %p135
      %p137 = scmp.ne.s32.totalorder %s126, %s129
      %p138 = scmp.eq.s32.totalorder %s18, 1
      %p139 = por %p137, %p138
      %p140 = scmp.ne.s32.totalorder %s129, %s130
      %p141 = scmp.eq.s32.totalorder %s18, 0
      %p142 = por %p140, %p141
      %p143 = scmp.ne.s32.totalorder %s129, %s130
      %p144 = scmp.eq.s32.totalorder %s19, 1
      %p145 = por %p143, %p144
      %p147 = scmp.ne.s32.totalorder %s130, %s146
      %p148 = scmp.eq.s32.totalorder %s19, 0
      %p149 = por %p147, %p148
      %p150 = scmp.le.s32.totalorder 1, %s13
      %p151 = scmp.lt.s32.totalorder %s13, 3
      %p152 = pnand %p150, %p151
      %p153 = pneg %p152
      // Predicated region
      $region9: #{tpu_custom_call.1} parent=5 // pred_check
        _
      $region10: #{tpu_custom_call.1} parent=5 // pred_check_branch
        %155 = sbr.rel (%p152) target = $region12
      $region11: #{tpu_custom_call.1} parent=5 // pred_region
        %s156 = ssub.s32 %s13, 1
        // Predicated region
        $region13: #{tpu_custom_call.1} parent=11 // pred_check
          %p157 = pneg %p72
        $region14: #{tpu_custom_call.1} parent=11 // pred_check_branch
          %159 = sbr.rel (%p157) target = $region16
        $region15: #{tpu_custom_call.1} parent=11 // pred_region
          _
        $region16: #{tpu_custom_call.1} parent=11 // pred_fallthru
          _
        // Predicated region
        $region17: #{tpu_custom_call.1} parent=11 // pred_check
          %p160 = pneg %p93
        $region18: #{tpu_custom_call.1} parent=11 // pred_check_branch
          %162 = sbr.rel (%p160) target = $region20
        $region19: #{tpu_custom_call.1} parent=11 // pred_region
          _
        $region20: #{tpu_custom_call.1} parent=11 // pred_fallthru
          _
        // Predicated region
        $region21: #{tpu_custom_call.1} parent=11 // pred_check
          %p163 = pneg %p114
        $region22: #{tpu_custom_call.1} parent=11 // pred_check_branch
          %165 = sbr.rel (%p163) target = $region24
        $region23: #{tpu_custom_call.1} parent=11 // pred_region
          _
        $region24: #{tpu_custom_call.1} parent=11 // pred_fallthru
          _
      $region12: #{tpu_custom_call.1} parent=5 // pred_fallthru
        _
      %p166 = scmp.lt.s32.totalorder %s13, 2
      // Predicated region
      $region25: #{tpu_custom_call.1} parent=5 // pred_check
        %p167 = pneg %p166
      $region26: #{tpu_custom_call.1} parent=5 // pred_check_branch
        %169 = sbr.rel (%p167) target = $region28
      $region27: #{tpu_custom_call.1} parent=5 // pred_region
        // Predicated region
        $region29: #{tpu_custom_call.1} parent=27 // pred_check
          %p170 = pneg %p45
        $region30: #{tpu_custom_call.1} parent=27 // pred_check_branch
          %172 = sbr.rel (%p170) target = $region32
        $region31: #{tpu_custom_call.1} parent=27 // pred_region
          %p173 = scmp.lt.s32.totalorder %s20, 1
          %s174 = scalar_select %p173, %s20, 1
          %s175 = smul.addr %s174, 2
          %s176 = smul.addr %s175, 8
          %s177 = scalar_lea.vmem %s0, %s176
        $region32: #{tpu_custom_call.1} parent=27 // pred_fallthru
          _
      $region28: #{tpu_custom_call.1} parent=5 // pred_fallthru
        _
      %p178 = scmp.le.s32.totalorder 1, %s13
      %p179 = scmp.lt.s32.totalorder %s13, 3
      %p180 = pnand %p178, %p179
      %p181 = pneg %p180
      // Predicated region
      $region33: #{tpu_custom_call.1} parent=5 // pred_check
        _
      $region34: #{tpu_custom_call.1} parent=5 // pred_check_branch
        %183 = sbr.rel (%p180) target = $region36
      $region35: #{tpu_custom_call.1} parent=5 // pred_region
        %s184 = ssub.s32 %s13, 1
        %p185 = scmp.lt.s32.totalorder %s22, 1
        %s186 = scalar_select %p185, %s22, 1
        %s187 = smul.addr %s186, 2
        %s188 = smul.addr %s187, 8
        %s189 = scalar_lea.vmem %s0, %s188
        %p190 = pneg %p51
        %p191 = pneg %p48
        %p192 = pneg %p72
        %p193 = pneg %p69
        %p194 = pneg %p93
        %p195 = pneg %p90
        %p196 = pneg %p114
        %p197 = pneg %p111
        %p198 = pneg %p142
        %p199 = pneg %p139
        %s200 = sand.u32 %s129, 1
        %s201 = scalar_lea.sflag [#allocation3], %s200
        %s202 = sand.u32 %s129, 1
        %s203 = smul.addr %s202, 16
        %s204 = scalar_lea.vmem [#allocation2], %s203
        %p205 = scmp.lt.s32.totalorder %s22, 1
        %s206 = scalar_select %p205, %s22, 1
        %s207 = smul.addr %s206, 2
        %s208 = smul.addr %s207, 8
        %s209 = scalar_lea.vmem %s0, %s208
        %v210 = vld [vmem:[%s3] sm:$0xff]
        %v211 = vld [vmem:[%s3 + $0x8] sm:$0xff]
        %v212 = vld [vmem:[%s3 + $0x10] sm:$0xff]
        %v213 = vld [vmem:[%s3 + $0x18] sm:$0xff]
        %v214 = vld [vmem:[%s3 + $0x20] sm:$0xff]
        %v215 = vld [vmem:[%s3 + $0x28] sm:$0xff]
        %v216 = vld [vmem:[%s3 + $0x30] sm:$0xff]
        %v217 = vld [vmem:[%s3 + $0x38] sm:$0xff]
        %v218 = vld [vmem:[%s3 + $0x40] sm:$0xff]
        %v219 = vld [vmem:[%s3 + $0x48] sm:$0xff]
        %v220 = vld [vmem:[%s3 + $0x50] sm:$0xff]
        %v221 = vld [vmem:[%s3 + $0x58] sm:$0xff]
        %v222 = vld [vmem:[%s3 + $0x60] sm:$0xff]
        %v223 = vld [vmem:[%s3 + $0x68] sm:$0xff]
        %v224 = vld [vmem:[%s3 + $0x70] sm:$0xff]
        %v225 = vld [vmem:[%s3 + $0x78] sm:$0xff]
        %v226 = vld [vmem:[%s3 + $0x80] sm:$0xff]
        %v227 = vld [vmem:[%s3 + $0x88] sm:$0xff]
        %v228 = vld [vmem:[%s209] sm:$0xff]
        %v229 = vld [vmem:[%s209 + $0x8] sm:$0xff]
        %v230 = vadd.f32 %v228, %v229
        %v231 = vrot.slane %v230, 4
        %v232 = vadd.f32 %v230, %v231
        %v233 = vrot.slane %v232, 2
        %v234 = vadd.f32 %v232, %v233
        %v235 = vrot.slane %v234, 1
        %v236 = vadd.f32 %v234, %v235
        %v237 = vmul.f32 %v236, 0.0625
        %v238 = vsub.f32 %v228, %v237
        %v239 = vsub.f32 %v229, %v237
        %v240 = vmul.f32 %v238, %v238
        %v241 = vmul.f32 %v239, %v239
        %v242 = vadd.f32 %v240, %v241
        %v243 = vrot.slane %v242, 4
        %v244 = vadd.f32 %v242, %v243
        %v245 = vrot.slane %v244, 2
        %v246 = vadd.f32 %v244, %v245
        %v247 = vrot.slane %v246, 1
        %v248 = vadd.f32 %v246, %v247
        %v249 = vmul.f32 %v248, 0.0625
        %v250 = vadd.f32 %v249, 1e-05
        %v251 = vrsqrt.pop %v250
        %v252 = vmul.f32 %v238, %v251
        %v253 = vmul.f32 %v239, %v251
        %255 = vset.pattern.permute.xlu0 0
        %256 = vperm.xlu0 %255, %v220
        %v257 = vpop.permute.xlu0 %256
        %260 = vset.pattern.permute.xlu0 0
        %261 = vperm.xlu0 %260, %v221
        %v262 = vpop.permute.xlu0 %261
        %v264 = vmul.f32 %v252, %v257
        %v265 = vmul.f32 %v253, %v262
        %267 = vset.pattern.permute.xlu0 0
        %268 = vperm.xlu0 %267, %v222
        %v269 = vpop.permute.xlu0 %268
        %272 = vset.pattern.permute.xlu0 0
        %273 = vperm.xlu0 %272, %v223
        %v274 = vpop.permute.xlu0 %273
        %v276 = vadd.f32 %v264, %v269
        %v277 = vadd.f32 %v265, %v274
        %v278 = vld [vmem:[%s1] sm:$0xff]
        %v279 = vld [vmem:[%s1 + $0x8] sm:$0xff]
        %v280 = vadd.f32 %v276, %v278
        %v281 = vadd.f32 %v277, %v279
        %v282 = vld [vmem:[%s2] sm:$0xff]
        %v283 = vld [vmem:[%s2 + $0x8] sm:$0xff]
        %v284 = vld [vmem:[%s2 + $0x10] sm:$0xff]
        %v285 = vld [vmem:[%s2 + $0x18] sm:$0xff]
        %v286 = vld [vmem:[%s2 + $0x20] sm:$0xff]
        %v287 = vld [vmem:[%s2 + $0x28] sm:$0xff]
        %v288 = vld [vmem:[%s2 + $0x30] sm:$0xff]
        %v289 = vld [vmem:[%s2 + $0x38] sm:$0xff]
        %v290 = vld [vmem:[%s2 + $0x40] sm:$0xff]
        %v291 = vld [vmem:[%s2 + $0x48] sm:$0xff]
        %v292 = vld [vmem:[%s2 + $0x50] sm:$0xff]
        %v293 = vld [vmem:[%s2 + $0x58] sm:$0xff]
        %v294 = vld [vmem:[%s2 + $0x60] sm:$0xff]
        %v295 = vld [vmem:[%s2 + $0x68] sm:$0xff]
        %v296 = vld [vmem:[%s2 + $0x70] sm:$0xff]
        %v297 = vld [vmem:[%s2 + $0x78] sm:$0xff]
        %vm298 = vcmask 130048
        %v300 = vsel %vm298, %v282, 0
        %v303 = vsel %vm298, %v283, 0
        %v306 = vsel %vm298, %v284, 0
        %v309 = vsel %vm298, %v285, 0
        %v312 = vsel %vm298, %v286, 0
        %v315 = vsel %vm298, %v287, 0
        %v318 = vsel %vm298, %v288, 0
        %v321 = vsel %vm298, %v289, 0
        %v324 = vsel %vm298, %v290, 0
        %v327 = vsel %vm298, %v291, 0
        %v330 = vsel %vm298, %v292, 0
        %v333 = vsel %vm298, %v293, 0
        %v336 = vsel %vm298, %v294, 0
        %v339 = vsel %vm298, %v295, 0
        %v342 = vsel %vm298, %v296, 0
        %v345 = vsel %vm298, %v297, 0
        %347 = vmatprep.subr.mxu0 0.0
        %348 = vmatpush1.msra.mxu0 0.0
        %349 = vmatprep.subr.mxu0 0.0
        %350 = vmatpush1.msra.mxu0 0.0
        %351 = vmatprep.subr.mxu0 0.0
        %352 = vmatpush1.msra.mxu0 0.0
        %353 = vmatprep.subr.mxu0 0.0
        %354 = vmatpush1.msra.mxu0 0.0
        %355 = vmatprep.subr.mxu0 0.0
        %356 = vmatpush1.msra.mxu0 0.0
        %357 = vmatprep.subr.mxu0 0.0
        %358 = vmatpush1.msra.mxu0 0.0
        %359 = vmatprep.subr.mxu0 0.0
        %360 = vmatpush1.msra.mxu0 0.0
        %361 = vmatprep.subr.mxu0 0.0
        %362 = vmatpush1.msra.mxu0 0.0
        %363 = vmatprep.subr.mxu0 0.0
        %364 = vmatpush1.msra.mxu0 0.0
        %365 = vmatprep.subr.mxu0 0.0
        %366 = vmatpush1.msra.mxu0 0.0
        %367 = vmatprep.subr.mxu0 0.0
        %368 = vmatpush1.msra.mxu0 0.0
        %369 = vmatprep.subr.mxu0 0.0
        %370 = vmatpush1.msra.mxu0 0.0
        %371 = vmatprep.subr.mxu0 0.0
        %372 = vmatpush1.msra.mxu0 0.0
        %373 = vmatprep.subr.mxu0 0.0
        %374 = vmatpush1.msra.mxu0 0.0
        %375 = vmatprep.subr.mxu0 0.0
        %376 = vmatpush1.msra.mxu0 %v281
        %377 = vmatprep.subr.mxu0 0.0
        %378 = vmatpush1.msra.mxu0 %v280
        %379 = vmatprep.subr.mxu0 0.0
        %380 = vmatpush2.msra.mxu0 0.0
        %381 = vmatprep.subr.mxu0 0.0
        %382 = vmatpush2.msra.mxu0 0.0
        %383 = vmatprep.subr.mxu0 0.0
        %384 = vmatpush2.msra.mxu0 0.0
        %385 = vmatprep.subr.mxu0 0.0
        %386 = vmatpush2.msra.mxu0 0.0
        %387 = vmatprep.subr.mxu0 0.0
        %388 = vmatpush2.msra.mxu0 0.0
        %389 = vmatprep.subr.mxu0 0.0
        %390 = vmatpush2.msra.mxu0 0.0
        %391 = vmatprep.subr.mxu0 0.0
        %392 = vmatpush2.msra.mxu0 0.0
        %393 = vmatprep.subr.mxu0 0.0
        %394 = vmatpush2.msra.mxu0 0.0
        %395 = vmatprep.subr.mxu0 0.0
        %396 = vmatpush2.msra.mxu0 0.0
        %397 = vmatprep.subr.mxu0 0.0
        %398 = vmatpush2.msra.mxu0 0.0
        %399 = vmatprep.subr.mxu0 0.0
        %400 = vmatpush2.msra.mxu0 0.0
        %401 = vmatprep.subr.mxu0 0.0
        %402 = vmatpush2.msra.mxu0 0.0
        %403 = vmatprep.subr.mxu0 0.0
        %404 = vmatpush2.msra.mxu0 0.0
        %405 = vmatprep.subr.mxu0 0.0
        %406 = vmatpush2.msra.mxu0 0.0
        %407 = vmatprep.subr.mxu0 0.0
        %408 = vmatpush2.msra.mxu0 0.0
        %409 = vmatprep.subr.mxu0 0.0
        %410 = vmatpush2.msra.mxu0 0.0
        %411 = vmatprep.mubr.f32.mxu0 0.0
        %412 = vmatmul.mubr.f32.gmra.mxu0 %v300
        %v413 = vpop.f32.mrf.mxu0
        %v414 = vadd.f32 0.0, %v413
        %v415 = vpop.f32.mrf.mxu0
        %416 = vmatprep.mubr.f32.mxu0 0.0
        %417 = vmatmul.mubr.f32.gmra.mxu0 %v303
        %v418 = vpop.f32.mrf.mxu0
        %v419 = vadd.f32 0.0, %v418
        %v420 = vpop.f32.mrf.mxu0
        %421 = vmatprep.mubr.f32.mxu0 0.0
        %422 = vmatmul.mubr.f32.gmra.mxu0 %v306
        %v423 = vpop.f32.mrf.mxu0
        %v424 = vadd.f32 0.0, %v423
        %v425 = vpop.f32.mrf.mxu0
        %426 = vmatprep.mubr.f32.mxu0 0.0
        %427 = vmatmul.mubr.f32.gmra.mxu0 %v309
        %v428 = vpop.f32.mrf.mxu0
        %v429 = vadd.f32 0.0, %v428
        %v430 = vpop.f32.mrf.mxu0
        %431 = vmatprep.mubr.f32.mxu0 0.0
        %432 = vmatmul.mubr.f32.gmra.mxu0 %v312
        %v433 = vpop.f32.mrf.mxu0
        %v434 = vadd.f32 0.0, %v433
        %v435 = vpop.f32.mrf.mxu0
        %436 = vmatprep.mubr.f32.mxu0 0.0
        %437 = vmatmul.mubr.f32.gmra.mxu0 %v315
        %v438 = vpop.f32.mrf.mxu0
        %v439 = vadd.f32 0.0, %v438
        %v440 = vpop.f32.mrf.mxu0
        %441 = vmatprep.mubr.f32.mxu0 0.0
        %442 = vmatmul.mubr.f32.gmra.mxu0 %v318
        %v443 = vpop.f32.mrf.mxu0
        %v444 = vadd.f32 0.0, %v443
        %v445 = vpop.f32.mrf.mxu0
        %446 = vmatprep.mubr.f32.mxu0 0.0
        %447 = vmatmul.mubr.f32.gmra.mxu0 %v321
        %v448 = vpop.f32.mrf.mxu0
        %v449 = vadd.f32 0.0, %v448
        %v450 = vpop.f32.mrf.mxu0
        %451 = vmatprep.mubr.f32.mxu0 0.0
        %452 = vmatmul.mubr.f32.gmra.mxu0 %v324
        %v453 = vpop.f32.mrf.mxu0
        %v454 = vadd.f32 0.0, %v453
        %v455 = vpop.f32.mrf.mxu0
        %456 = vmatprep.mubr.f32.mxu0 0.0
        %457 = vmatmul.mubr.f32.gmra.mxu0 %v327
        %v458 = vpop.f32.mrf.mxu0
        %v459 = vadd.f32 0.0, %v458
        %v460 = vpop.f32.mrf.mxu0
        %461 = vmatprep.mubr.f32.mxu0 0.0
        %462 = vmatmul.mubr.f32.gmra.mxu0 %v330
        %v463 = vpop.f32.mrf.mxu0
        %v464 = vadd.f32 0.0, %v463
        %v465 = vpop.f32.mrf.mxu0
        %466 = vmatprep.mubr.f32.mxu0 0.0
        %467 = vmatmul.mubr.f32.gmra.mxu0 %v333
        %v468 = vpop.f32.mrf.mxu0
        %v469 = vadd.f32 0.0, %v468
        %v470 = vpop.f32.mrf.mxu0
        %471 = vmatprep.mubr.f32.mxu0 0.0
        %472 = vmatmul.mubr.f32.gmra.mxu0 %v336
        %v473 = vpop.f32.mrf.mxu0
        %v474 = vadd.f32 0.0, %v473
        %v475 = vpop.f32.mrf.mxu0
        %476 = vmatprep.mubr.f32.mxu0 0.0
        %477 = vmatmul.mubr.f32.gmra.mxu0 %v339
        %v478 = vpop.f32.mrf.mxu0
        %v479 = vadd.f32 0.0, %v478
        %v480 = vpop.f32.mrf.mxu0
        %481 = vmatprep.mubr.f32.mxu0 0.0
        %482 = vmatmul.mubr.f32.gmra.mxu0 %v342
        %v483 = vpop.f32.mrf.mxu0
        %v484 = vadd.f32 0.0, %v483
        %v485 = vpop.f32.mrf.mxu0
        %486 = vmatprep.mubr.f32.mxu0 0.0
        %487 = vmatmul.mubr.f32.gmra.mxu0 %v345
        %v488 = vpop.f32.mrf.mxu0
        %v489 = vadd.f32 0.0, %v488
        %v490 = vpop.f32.mrf.mxu0
        %491 = vdwg.mxu0
        %493 = vset.pattern.permute.xlu0 0
        %494 = vperm.xlu0 %493, %v210
        %v495 = vpop.permute.xlu0 %494
        %498 = vset.pattern.permute.xlu0 0
        %499 = vperm.xlu0 %498, %v211
        %v500 = vpop.permute.xlu0 %499
        %503 = vset.pattern.permute.xlu0 0
        %504 = vperm.xlu0 %503, %v212
        %v505 = vpop.permute.xlu0 %504
        %508 = vset.pattern.permute.xlu0 0
        %509 = vperm.xlu0 %508, %v213
        %v510 = vpop.permute.xlu0 %509
        %v512 = vadd.f32 %v414, %v495
        %v513 = vadd.f32 %v419, %v500
        %v514 = vadd.f32 %v424, %v505
        %v515 = vadd.f32 %v429, %v510
        %517 = vset.pattern.permute.xlu0 0
        %518 = vperm.xlu0 %517, %v214
        %v519 = vpop.permute.xlu0 %518
        %522 = vset.pattern.permute.xlu0 0
        %523 = vperm.xlu0 %522, %v215
        %v524 = vpop.permute.xlu0 %523
        %527 = vset.pattern.permute.xlu0 0
        %528 = vperm.xlu0 %527, %v216
        %v529 = vpop.permute.xlu0 %528
        %532 = vset.pattern.permute.xlu0 0
        %533 = vperm.xlu0 %532, %v217
        %v534 = vpop.permute.xlu0 %533
        %v536 = vadd.f32 %v434, %v519
        %v537 = vadd.f32 %v439, %v524
        %v538 = vadd.f32 %v444, %v529
        %v539 = vadd.f32 %v449, %v534
        %540 = vxpose.xlu0.b32.start [1/16] %v512, 128
        %541 = vxpose.xlu0.b32.cont [2/16] 0.0, 128
        %542 = vxpose.xlu0.b32.cont [3/16] 0.0, 128
        %543 = vxpose.xlu0.b32.cont [4/16] 0.0, 128
        %544 = vxpose.xlu0.b32.cont [5/16] 0.0, 128
        %545 = vxpose.xlu0.b32.cont [6/16] 0.0, 128
        %546 = vxpose.xlu0.b32.cont [7/16] 0.0, 128
        %547 = vxpose.xlu0.b32.cont [8/16] 0.0, 128
        %548 = vxpose.xlu0.b32.cont [9/16] 0.0, 128
        %549 = vxpose.xlu0.b32.cont [10/16] 0.0, 128
        %550 = vxpose.xlu0.b32.cont [11/16] 0.0, 128
        %551 = vxpose.xlu0.b32.cont [12/16] 0.0, 128
        %552 = vxpose.xlu0.b32.cont [13/16] 0.0, 128
        %553 = vxpose.xlu0.b32.cont [14/16] 0.0, 128
        %554 = vxpose.xlu0.b32.cont [15/16] 0.0, 128
        %555 = vxpose.xlu0.b32.end [16/16] 0.0, 128
        %v556 = vpop.trf.xlu0
        %v557 = vpop.trf.xlu0
        %v558 = vpop.trf.xlu0
        %v559 = vpop.trf.xlu0
        %v560 = vpop.trf.xlu0
        %v561 = vpop.trf.xlu0
        %v562 = vpop.trf.xlu0
        %v563 = vpop.trf.xlu0
        %v564 = vpop.trf.xlu0
        %v565 = vpop.trf.xlu0
        %v566 = vpop.trf.xlu0
        %v567 = vpop.trf.xlu0
        %v568 = vpop.trf.xlu0
        %v569 = vpop.trf.xlu0
        %v570 = vpop.trf.xlu0
        %v571 = vpop.trf.xlu0
        %vm572 = vcmask 64512
        %v574 = vsel %vm572, %v556, 0
        %v577 = vsel %vm572, %v557, 0
        %v580 = vsel %vm572, %v558, 0
        %v583 = vsel %vm572, %v559, 0
        %v586 = vsel %vm572, %v560, 0
        %v589 = vsel %vm572, %v561, 0
        %v592 = vsel %vm572, %v562, 0
        %v595 = vsel %vm572, %v563, 0
        %v598 = vsel %vm572, %v564, 0
        %v601 = vsel %vm572, %v565, 0
        %v604 = vsel %vm572, %v566, 0
        %v607 = vsel %vm572, %v567, 0
        %v610 = vsel %vm572, %v568, 0
        %v613 = vsel %vm572, %v569, 0
        %v616 = vsel %vm572, %v570, 0
        %v619 = vsel %vm572, %v571, 0
        %621 = vmatprep.subr.mxu0 0.0
        %622 = vmatpush1.msra.mxu0 0.0
        %623 = vmatprep.subr.mxu0 0.0
        %624 = vmatpush1.msra.mxu0 0.0
        %625 = vmatprep.subr.mxu0 0.0
        %626 = vmatpush1.msra.mxu0 0.0
        %627 = vmatprep.subr.mxu0 0.0
        %628 = vmatpush1.msra.mxu0 0.0
        %629 = vmatprep.subr.mxu0 0.0
        %630 = vmatpush1.msra.mxu0 0.0
        %631 = vmatprep.subr.mxu0 0.0
        %632 = vmatpush1.msra.mxu0 0.0
        %633 = vmatprep.subr.mxu0 0.0
        %634 = vmatpush1.msra.mxu0 0.0
        %635 = vmatprep.subr.mxu0 0.0
        %636 = vmatpush1.msra.mxu0 0.0
        %637 = vmatprep.subr.mxu0 0.0
        %638 = vmatpush1.msra.mxu0 0.0
        %639 = vmatprep.subr.mxu0 0.0
        %640 = vmatpush1.msra.mxu0 0.0
        %641 = vmatprep.subr.mxu0 0.0
        %642 = vmatpush1.msra.mxu0 0.0
        %643 = vmatprep.subr.mxu0 0.0
        %644 = vmatpush1.msra.mxu0 0.0
        %645 = vmatprep.subr.mxu0 0.0
        %646 = vmatpush1.msra.mxu0 0.0
        %647 = vmatprep.subr.mxu0 0.0
        %648 = vmatpush1.msra.mxu0 0.0
        %649 = vmatprep.subr.mxu0 0.0
        %650 = vmatpush1.msra.mxu0 0.0
        %651 = vmatprep.subr.mxu0 0.0
        %652 = vmatpush1.msra.mxu0 %v536
        %653 = vmatprep.subr.mxu0 0.0
        %654 = vmatpush2.msra.mxu0 0.0
        %655 = vmatprep.subr.mxu0 0.0
        %656 = vmatpush2.msra.mxu0 0.0
        %657 = vmatprep.subr.mxu0 0.0
        %658 = vmatpush2.msra.mxu0 0.0
        %659 = vmatprep.subr.mxu0 0.0
        %660 = vmatpush2.msra.mxu0 0.0
        %661 = vmatprep.subr.mxu0 0.0
        %662 = vmatpush2.msra.mxu0 0.0
        %663 = vmatprep.subr.mxu0 0.0
        %664 = vmatpush2.msra.mxu0 0.0
        %665 = vmatprep.subr.mxu0 0.0
        %666 = vmatpush2.msra.mxu0 0.0
        %667 = vmatprep.subr.mxu0 0.0
        %668 = vmatpush2.msra.mxu0 0.0
        %669 = vmatprep.subr.mxu0 0.0
        %670 = vmatpush2.msra.mxu0 0.0
        %671 = vmatprep.subr.mxu0 0.0
        %672 = vmatpush2.msra.mxu0 0.0
        %673 = vmatprep.subr.mxu0 0.0
        %674 = vmatpush2.msra.mxu0 0.0
        %675 = vmatprep.subr.mxu0 0.0
        %676 = vmatpush2.msra.mxu0 0.0
        %677 = vmatprep.subr.mxu0 0.0
        %678 = vmatpush2.msra.mxu0 0.0
        %679 = vmatprep.subr.mxu0 0.0
        %680 = vmatpush2.msra.mxu0 0.0
        %681 = vmatprep.subr.mxu0 0.0
        %682 = vmatpush2.msra.mxu0 0.0
        %683 = vmatprep.subr.mxu0 0.0
        %684 = vmatpush2.msra.mxu0 0.0
        %685 = vmatprep.mubr.f32.mxu0 0.0
        %686 = vmatmul.mubr.f32.gmra.mxu0 %v574
        %v687 = vpop.f32.mrf.mxu0
        %v688 = vadd.f32 0.0, %v687
        %v689 = vpop.f32.mrf.mxu0
        %690 = vmatprep.mubr.f32.mxu0 0.0
        %691 = vmatmul.mubr.f32.gmra.mxu0 %v577
        %v692 = vpop.f32.mrf.mxu0
        %v693 = vadd.f32 0.0, %v692
        %v694 = vpop.f32.mrf.mxu0
        %695 = vmatprep.mubr.f32.mxu0 0.0
        %696 = vmatmul.mubr.f32.gmra.mxu0 %v580
        %v697 = vpop.f32.mrf.mxu0
        %v698 = vadd.f32 0.0, %v697
        %v699 = vpop.f32.mrf.mxu0
        %700 = vmatprep.mubr.f32.mxu0 0.0
        %701 = vmatmul.mubr.f32.gmra.mxu0 %v583
        %v702 = vpop.f32.mrf.mxu0
        %v703 = vadd.f32 0.0, %v702
        %v704 = vpop.f32.mrf.mxu0
        %705 = vmatprep.mubr.f32.mxu0 0.0
        %706 = vmatmul.mubr.f32.gmra.mxu0 %v586
        %v707 = vpop.f32.mrf.mxu0
        %v708 = vadd.f32 0.0, %v707
        %v709 = vpop.f32.mrf.mxu0
        %710 = vmatprep.mubr.f32.mxu0 0.0
        %711 = vmatmul.mubr.f32.gmra.mxu0 %v589
        %v712 = vpop.f32.mrf.mxu0
        %v713 = vadd.f32 0.0, %v712
        %v714 = vpop.f32.mrf.mxu0
        %715 = vmatprep.mubr.f32.mxu0 0.0
        %716 = vmatmul.mubr.f32.gmra.mxu0 %v592
        %v717 = vpop.f32.mrf.mxu0
        %v718 = vadd.f32 0.0, %v717
        %v719 = vpop.f32.mrf.mxu0
        %720 = vmatprep.mubr.f32.mxu0 0.0
        %721 = vmatmul.mubr.f32.gmra.mxu0 %v595
        %v722 = vpop.f32.mrf.mxu0
        %v723 = vadd.f32 0.0, %v722
        %v724 = vpop.f32.mrf.mxu0
        %725 = vmatprep.mubr.f32.mxu0 0.0
        %726 = vmatmul.mubr.f32.gmra.mxu0 %v598
        %v727 = vpop.f32.mrf.mxu0
        %v728 = vadd.f32 0.0, %v727
        %v729 = vpop.f32.mrf.mxu0
        %730 = vmatprep.mubr.f32.mxu0 0.0
        %731 = vmatmul.mubr.f32.gmra.mxu0 %v601
        %v732 = vpop.f32.mrf.mxu0
        %v733 = vadd.f32 0.0, %v732
        %v734 = vpop.f32.mrf.mxu0
        %735 = vmatprep.mubr.f32.mxu0 0.0
        %736 = vmatmul.mubr.f32.gmra.mxu0 %v604
        %v737 = vpop.f32.mrf.mxu0
        %v738 = vadd.f32 0.0, %v737
        %v739 = vpop.f32.mrf.mxu0
        %740 = vmatprep.mubr.f32.mxu0 0.0
        %741 = vmatmul.mubr.f32.gmra.mxu0 %v607
        %v742 = vpop.f32.mrf.mxu0
        %v743 = vadd.f32 0.0, %v742
        %v744 = vpop.f32.mrf.mxu0
        %745 = vmatprep.mubr.f32.mxu0 0.0
        %746 = vmatmul.mubr.f32.gmra.mxu0 %v610
        %v747 = vpop.f32.mrf.mxu0
        %v748 = vadd.f32 0.0, %v747
        %v749 = vpop.f32.mrf.mxu0
        %750 = vmatprep.mubr.f32.mxu0 0.0
        %751 = vmatmul.mubr.f32.gmra.mxu0 %v613
        %v752 = vpop.f32.mrf.mxu0
        %v753 = vadd.f32 0.0, %v752
        %v754 = vpop.f32.mrf.mxu0
        %755 = vmatprep.mubr.f32.mxu0 0.0
        %756 = vmatmul.mubr.f32.gmra.mxu0 %v616
        %v757 = vpop.f32.mrf.mxu0
        %v758 = vadd.f32 0.0, %v757
        %v759 = vpop.f32.mrf.mxu0
        %760 = vmatprep.mubr.f32.mxu0 0.0
        %761 = vmatmul.mubr.f32.gmra.mxu0 %v619
        %v762 = vpop.f32.mrf.mxu0
        %v763 = vadd.f32 0.0, %v762
        %v764 = vpop.f32.mrf.mxu0
        %765 = vdwg.mxu0
        %766 = vmax.xlane.f32.xlu0 %v688
        %v767 = vpop.xlane.xlu0 %766
        %768 = vmax.xlane.f32.xlu0 %v693
        %v769 = vpop.xlane.xlu0 %768
        %770 = vmax.xlane.f32.xlu0 %v698
        %v771 = vpop.xlane.xlu0 %770
        %772 = vmax.xlane.f32.xlu0 %v703
        %v773 = vpop.xlane.xlu0 %772
        %774 = vmax.xlane.f32.xlu0 %v708
        %v775 = vpop.xlane.xlu0 %774
        %776 = vmax.xlane.f32.xlu0 %v713
        %v777 = vpop.xlane.xlu0 %776
        %778 = vmax.xlane.f32.xlu0 %v718
        %v779 = vpop.xlane.xlu0 %778
        %780 = vmax.xlane.f32.xlu0 %v723
        %v781 = vpop.xlane.xlu0 %780
        %782 = vmax.xlane.f32.xlu0 %v728
        %v783 = vpop.xlane.xlu0 %782
        %784 = vmax.xlane.f32.xlu0 %v733
        %v785 = vpop.xlane.xlu0 %784
        %786 = vmax.xlane.f32.xlu0 %v738
        %v787 = vpop.xlane.xlu0 %786
        %788 = vmax.xlane.f32.xlu0 %v743
        %v789 = vpop.xlane.xlu0 %788
        %790 = vmax.xlane.f32.xlu0 %v748
        %v791 = vpop.xlane.xlu0 %790
        %792 = vmax.xlane.f32.xlu0 %v753
        %v793 = vpop.xlane.xlu0 %792
        %794 = vmax.xlane.f32.xlu0 %v758
        %v795 = vpop.xlane.xlu0 %794
        %796 = vmax.xlane.f32.xlu0 %v763
        %v797 = vpop.xlane.xlu0 %796
        %v798 = vsub.f32 %v688, %v767
        %v799 = vsub.f32 %v693, %v769
        %v800 = vsub.f32 %v698, %v771
        %v801 = vsub.f32 %v703, %v773
        %v802 = vsub.f32 %v708, %v775
        %v803 = vsub.f32 %v713, %v777
        %v804 = vsub.f32 %v718, %v779
        %v805 = vsub.f32 %v723, %v781
        %v806 = vsub.f32 %v728, %v783
        %v807 = vsub.f32 %v733, %v785
        %v808 = vsub.f32 %v738, %v787
        %v809 = vsub.f32 %v743, %v789
        %v810 = vsub.f32 %v748, %v791
        %v811 = vsub.f32 %v753, %v793
        %v812 = vsub.f32 %v758, %v795
        %v813 = vsub.f32 %v763, %v797
        %v814 = vmul.f32 %v798, 1.442695
        %v815 = vpow.pop %v814
        %v816 = vmul.f32 %v799, 1.442695
        %v817 = vpow.pop %v816
        %v818 = vmul.f32 %v800, 1.442695
        %v819 = vpow.pop %v818
        %v820 = vmul.f32 %v801, 1.442695
        %v821 = vpow.pop %v820
        %v822 = vmul.f32 %v802, 1.442695
        %v823 = vpow.pop %v822
        %v824 = vmul.f32 %v803, 1.442695
        %v825 = vpow.pop %v824
        %v826 = vmul.f32 %v804, 1.442695
        %v827 = vpow.pop %v826
        %v828 = vmul.f32 %v805, 1.442695
        %v829 = vpow.pop %v828
        %v830 = vmul.f32 %v806, 1.442695
        %v831 = vpow.pop %v830
        %v832 = vmul.f32 %v807, 1.442695
        %v833 = vpow.pop %v832
        %v834 = vmul.f32 %v808, 1.442695
        %v835 = vpow.pop %v834
        %v836 = vmul.f32 %v809, 1.442695
        %v837 = vpow.pop %v836
        %v838 = vmul.f32 %v810, 1.442695
        %v839 = vpow.pop %v838
        %v840 = vmul.f32 %v811, 1.442695
        %v841 = vpow.pop %v840
        %v842 = vmul.f32 %v812, 1.442695
        %v843 = vpow.pop %v842
        %v844 = vmul.f32 %v813, 1.442695
        %v845 = vpow.pop %v844
        %846 = vadd.xlane.f32.xlu0 %v815
        %v847 = vpop.xlane.xlu0 %846
        %848 = vadd.xlane.f32.xlu0 %v817
        %v849 = vpop.xlane.xlu0 %848
        %850 = vadd.xlane.f32.xlu0 %v819
        %v851 = vpop.xlane.xlu0 %850
        %852 = vadd.xlane.f32.xlu0 %v821
        %v853 = vpop.xlane.xlu0 %852
        %854 = vadd.xlane.f32.xlu0 %v823
        %v855 = vpop.xlane.xlu0 %854
        %856 = vadd.xlane.f32.xlu0 %v825
        %v857 = vpop.xlane.xlu0 %856
        %858 = vadd.xlane.f32.xlu0 %v827
        %v859 = vpop.xlane.xlu0 %858
        %860 = vadd.xlane.f32.xlu0 %v829
        %v861 = vpop.xlane.xlu0 %860
        %862 = vadd.xlane.f32.xlu0 %v831
        %v863 = vpop.xlane.xlu0 %862
        %864 = vadd.xlane.f32.xlu0 %v833
        %v865 = vpop.xlane.xlu0 %864
        %866 = vadd.xlane.f32.xlu0 %v835
        %v867 = vpop.xlane.xlu0 %866
        %868 = vadd.xlane.f32.xlu0 %v837
        %v869 = vpop.xlane.xlu0 %868
        %870 = vadd.xlane.f32.xlu0 %v839
        %v871 = vpop.xlane.xlu0 %870
        %872 = vadd.xlane.f32.xlu0 %v841
        %v873 = vpop.xlane.xlu0 %872
        %874 = vadd.xlane.f32.xlu0 %v843
        %v875 = vpop.xlane.xlu0 %874
        %876 = vadd.xlane.f32.xlu0 %v845
        %v877 = vpop.xlane.xlu0 %876
        %v878 = vrcp.pop %v847
        %v879 = vrcp.pop %v849
        %v880 = vrcp.pop %v851
        %v881 = vrcp.pop %v853
        %v882 = vrcp.pop %v855
        %v883 = vrcp.pop %v857
        %v884 = vrcp.pop %v859
        %v885 = vrcp.pop %v861
        %v886 = vrcp.pop %v863
        %v887 = vrcp.pop %v865
        %v888 = vrcp.pop %v867
        %v889 = vrcp.pop %v869
        %v890 = vrcp.pop %v871
        %v891 = vrcp.pop %v873
        %v892 = vrcp.pop %v875
        %v893 = vrcp.pop %v877
        %v894 = vmul.f32 %v847, %v878
        %v895 = vmul.f32 %v849, %v879
        %v896 = vmul.f32 %v851, %v880
        %v897 = vmul.f32 %v853, %v881
        %v898 = vmul.f32 %v855, %v882
        %v899 = vmul.f32 %v857, %v883
        %v900 = vmul.f32 %v859, %v884
        %v901 = vmul.f32 %v861, %v885
        %v902 = vmul.f32 %v863, %v886
        %v903 = vmul.f32 %v865, %v887
        %v904 = vmul.f32 %v867, %v888
        %v905 = vmul.f32 %v869, %v889
        %v906 = vmul.f32 %v871, %v890
        %v907 = vmul.f32 %v873, %v891
        %v908 = vmul.f32 %v875, %v892
        %v909 = vmul.f32 %v877, %v893
        %v910 = vsub.f32 2.0, %v894
        %v911 = vsub.f32 2.0, %v895
        %v912 = vsub.f32 2.0, %v896
        %v913 = vsub.f32 2.0, %v897
        %v914 = vsub.f32 2.0, %v898
        %v915 = vsub.f32 2.0, %v899
        %v916 = vsub.f32 2.0, %v900
        %v917 = vsub.f32 2.0, %v901
        %v918 = vsub.f32 2.0, %v902
        %v919 = vsub.f32 2.0, %v903
        %v920 = vsub.f32 2.0, %v904
        %v921 = vsub.f32 2.0, %v905
        %v922 = vsub.f32 2.0, %v906
        %v923 = vsub.f32 2.0, %v907
        %v924 = vsub.f32 2.0, %v908
        %v925 = vsub.f32 2.0, %v909
        %v926 = vmul.f32 %v878, %v910
        %v927 = vmul.f32 %v879, %v911
        %v928 = vmul.f32 %v880, %v912
        %v929 = vmul.f32 %v881, %v913
        %v930 = vmul.f32 %v882, %v914
        %v931 = vmul.f32 %v883, %v915
        %v932 = vmul.f32 %v884, %v916
        %v933 = vmul.f32 %v885, %v917
        %v934 = vmul.f32 %v886, %v918
        %v935 = vmul.f32 %v887, %v919
        %v936 = vmul.f32 %v888, %v920
        %v937 = vmul.f32 %v889, %v921
        %v938 = vmul.f32 %v890, %v922
        %v939 = vmul.f32 %v891, %v923
        %v940 = vmul.f32 %v892, %v924
        %v941 = vmul.f32 %v893, %v925
        %v942 = vmul.f32 %v815, %v926
        %v943 = vmul.f32 %v817, %v927
        %v944 = vmul.f32 %v819, %v928
        %v945 = vmul.f32 %v821, %v929
        %v946 = vmul.f32 %v823, %v930
        %v947 = vmul.f32 %v825, %v931
        %v948 = vmul.f32 %v827, %v932
        %v949 = vmul.f32 %v829, %v933
        %v950 = vmul.f32 %v831, %v934
        %v951 = vmul.f32 %v833, %v935
        %v952 = vmul.f32 %v835, %v936
        %v953 = vmul.f32 %v837, %v937
        %v954 = vmul.f32 %v839, %v938
        %v955 = vmul.f32 %v841, %v939
        %v956 = vmul.f32 %v843, %v940
        %v957 = vmul.f32 %v845, %v941
        %958 = vxpose.xlu0.b32.start [1/16] %v513, 128
        %959 = vxpose.xlu0.b32.cont [2/16] 0.0, 128
        %960 = vxpose.xlu0.b32.cont [3/16] 0.0, 128
        %961 = vxpose.xlu0.b32.cont [4/16] 0.0, 128
        %962 = vxpose.xlu0.b32.cont [5/16] 0.0, 128
        %963 = vxpose.xlu0.b32.cont [6/16] 0.0, 128
        %964 = vxpose.xlu0.b32.cont [7/16] 0.0, 128
        %965 = vxpose.xlu0.b32.cont [8/16] 0.0, 128
        %966 = vxpose.xlu0.b32.cont [9/16] 0.0, 128
        %967 = vxpose.xlu0.b32.cont [10/16] 0.0, 128
        %968 = vxpose.xlu0.b32.cont [11/16] 0.0, 128
        %969 = vxpose.xlu0.b32.cont [12/16] 0.0, 128
        %970 = vxpose.xlu0.b32.cont [13/16] 0.0, 128
        %971 = vxpose.xlu0.b32.cont [14/16] 0.0, 128
        %972 = vxpose.xlu0.b32.cont [15/16] 0.0, 128
        %973 = vxpose.xlu0.b32.end [16/16] 0.0, 128
        %v974 = vpop.trf.xlu0
        %v975 = vpop.trf.xlu0
        %v976 = vpop.trf.xlu0
        %v977 = vpop.trf.xlu0
        %v978 = vpop.trf.xlu0
        %v979 = vpop.trf.xlu0
        %v980 = vpop.trf.xlu0
        %v981 = vpop.trf.xlu0
        %v982 = vpop.trf.xlu0
        %v983 = vpop.trf.xlu0
        %v984 = vpop.trf.xlu0
        %v985 = vpop.trf.xlu0
        %v986 = vpop.trf.xlu0
        %v987 = vpop.trf.xlu0
        %v988 = vpop.trf.xlu0
        %v989 = vpop.trf.xlu0
        %v991 = vsel %vm572, %v974, 0
        %v994 = vsel %vm572, %v975, 0
        %v997 = vsel %vm572, %v976, 0
        %v1000 = vsel %vm572, %v977, 0
        %v1003 = vsel %vm572, %v978, 0
        %v1006 = vsel %vm572, %v979, 0
        %v1009 = vsel %vm572, %v980, 0
        %v1012 = vsel %vm572, %v981, 0
        %v1015 = vsel %vm572, %v982, 0
        %v1018 = vsel %vm572, %v983, 0
        %v1021 = vsel %vm572, %v984, 0
        %v1024 = vsel %vm572, %v985, 0
        %v1027 = vsel %vm572, %v986, 0
        %v1030 = vsel %vm572, %v987, 0
        %v1033 = vsel %vm572, %v988, 0
        %v1036 = vsel %vm572, %v989, 0
        %1038 = vmatprep.subr.mxu0 0.0
        %1039 = vmatpush1.msra.mxu0 0.0
        %1040 = vmatprep.subr.mxu0 0.0
        %1041 = vmatpush1.msra.mxu0 0.0
        %1042 = vmatprep.subr.mxu0 0.0
        %1043 = vmatpush1.msra.mxu0 0.0
        %1044 = vmatprep.subr.mxu0 0.0
        %1045 = vmatpush1.msra.mxu0 0.0
        %1046 = vmatprep.subr.mxu0 0.0
        %1047 = vmatpush1.msra.mxu0 0.0
        %1048 = vmatprep.subr.mxu0 0.0
        %1049 = vmatpush1.msra.mxu0 0.0
        %1050 = vmatprep.subr.mxu0 0.0
        %1051 = vmatpush1.msra.mxu0 0.0
        %1052 = vmatprep.subr.mxu0 0.0
        %1053 = vmatpush1.msra.mxu0 0.0
        %1054 = vmatprep.subr.mxu0 0.0
        %1055 = vmatpush1.msra.mxu0 0.0
        %1056 = vmatprep.subr.mxu0 0.0
        %1057 = vmatpush1.msra.mxu0 0.0
        %1058 = vmatprep.subr.mxu0 0.0
        %1059 = vmatpush1.msra.mxu0 0.0
        %1060 = vmatprep.subr.mxu0 0.0
        %1061 = vmatpush1.msra.mxu0 0.0
        %1062 = vmatprep.subr.mxu0 0.0
        %1063 = vmatpush1.msra.mxu0 0.0
        %1064 = vmatprep.subr.mxu0 0.0
        %1065 = vmatpush1.msra.mxu0 0.0
        %1066 = vmatprep.subr.mxu0 0.0
        %1067 = vmatpush1.msra.mxu0 0.0
        %1068 = vmatprep.subr.mxu0 0.0
        %1069 = vmatpush1.msra.mxu0 %v537
        %1070 = vmatprep.subr.mxu0 0.0
        %1071 = vmatpush2.msra.mxu0 0.0
        %1072 = vmatprep.subr.mxu0 0.0
        %1073 = vmatpush2.msra.mxu0 0.0
        %1074 = vmatprep.subr.mxu0 0.0
        %1075 = vmatpush2.msra.mxu0 0.0
        %1076 = vmatprep.subr.mxu0 0.0
        %1077 = vmatpush2.msra.mxu0 0.0
        %1078 = vmatprep.subr.mxu0 0.0
        %1079 = vmatpush2.msra.mxu0 0.0
        %1080 = vmatprep.subr.mxu0 0.0
        %1081 = vmatpush2.msra.mxu0 0.0
        %1082 = vmatprep.subr.mxu0 0.0
        %1083 = vmatpush2.msra.mxu0 0.0
        %1084 = vmatprep.subr.mxu0 0.0
        %1085 = vmatpush2.msra.mxu0 0.0
        %1086 = vmatprep.subr.mxu0 0.0
        %1087 = vmatpush2.msra.mxu0 0.0
        %1088 = vmatprep.subr.mxu0 0.0
        %1089 = vmatpush2.msra.mxu0 0.0
        %1090 = vmatprep.subr.mxu0 0.0
        %1091 = vmatpush2.msra.mxu0 0.0
        %1092 = vmatprep.subr.mxu0 0.0
        %1093 = vmatpush2.msra.mxu0 0.0
        %1094 = vmatprep.subr.mxu0 0.0
        %1095 = vmatpush2.msra.mxu0 0.0
        %1096 = vmatprep.subr.mxu0 0.0
        %1097 = vmatpush2.msra.mxu0 0.0
        %1098 = vmatprep.subr.mxu0 0.0
        %1099 = vmatpush2.msra.mxu0 0.0
        %1100 = vmatprep.subr.mxu0 0.0
        %1101 = vmatpush2.msra.mxu0 0.0
        %1102 = vmatprep.mubr.f32.mxu0 0.0
        %1103 = vmatmul.mubr.f32.gmra.mxu0 %v991
        %v1104 = vpop.f32.mrf.mxu0
        %v1105 = vadd.f32 0.0, %v1104
        %v1106 = vpop.f32.mrf.mxu0
        %1107 = vmatprep.mubr.f32.mxu0 0.0
        %1108 = vmatmul.mubr.f32.gmra.mxu0 %v994
        %v1109 = vpop.f32.mrf.mxu0
        %v1110 = vadd.f32 0.0, %v1109
        %v1111 = vpop.f32.mrf.mxu0
        %1112 = vmatprep.mubr.f32.mxu0 0.0
        %1113 = vmatmul.mubr.f32.gmra.mxu0 %v997
        %v1114 = vpop.f32.mrf.mxu0
        %v1115 = vadd.f32 0.0, %v1114
        %v1116 = vpop.f32.mrf.mxu0
        %1117 = vmatprep.mubr.f32.mxu0 0.0
        %1118 = vmatmul.mubr.f32.gmra.mxu0 %v1000
        %v1119 = vpop.f32.mrf.mxu0
        %v1120 = vadd.f32 0.0, %v1119
        %v1121 = vpop.f32.mrf.mxu0
        %1122 = vmatprep.mubr.f32.mxu0 0.0
        %1123 = vmatmul.mubr.f32.gmra.mxu0 %v1003
        %v1124 = vpop.f32.mrf.mxu0
        %v1125 = vadd.f32 0.0, %v1124
        %v1126 = vpop.f32.mrf.mxu0
        %1127 = vmatprep.mubr.f32.mxu0 0.0
        %1128 = vmatmul.mubr.f32.gmra.mxu0 %v1006
        %v1129 = vpop.f32.mrf.mxu0
        %v1130 = vadd.f32 0.0, %v1129
        %v1131 = vpop.f32.mrf.mxu0
        %1132 = vmatprep.mubr.f32.mxu0 0.0
        %1133 = vmatmul.mubr.f32.gmra.mxu0 %v1009
        %v1134 = vpop.f32.mrf.mxu0
        %v1135 = vadd.f32 0.0, %v1134
        %v1136 = vpop.f32.mrf.mxu0
        %1137 = vmatprep.mubr.f32.mxu0 0.0
        %1138 = vmatmul.mubr.f32.gmra.mxu0 %v1012
        %v1139 = vpop.f32.mrf.mxu0
        %v1140 = vadd.f32 0.0, %v1139
        %v1141 = vpop.f32.mrf.mxu0
        %1142 = vmatprep.mubr.f32.mxu0 0.0
        %1143 = vmatmul.mubr.f32.gmra.mxu0 %v1015
        %v1144 = vpop.f32.mrf.mxu0
        %v1145 = vadd.f32 0.0, %v1144
        %v1146 = vpop.f32.mrf.mxu0
        %1147 = vmatprep.mubr.f32.mxu0 0.0
        %1148 = vmatmul.mubr.f32.gmra.mxu0 %v1018
        %v1149 = vpop.f32.mrf.mxu0
        %v1150 = vadd.f32 0.0, %v1149
        %v1151 = vpop.f32.mrf.mxu0
        %1152 = vmatprep.mubr.f32.mxu0 0.0
        %1153 = vmatmul.mubr.f32.gmra.mxu0 %v1021
        %v1154 = vpop.f32.mrf.mxu0
        %v1155 = vadd.f32 0.0, %v1154
        %v1156 = vpop.f32.mrf.mxu0
        %1157 = vmatprep.mubr.f32.mxu0 0.0
        %1158 = vmatmul.mubr.f32.gmra.mxu0 %v1024
        %v1159 = vpop.f32.mrf.mxu0
        %v1160 = vadd.f32 0.0, %v1159
        %v1161 = vpop.f32.mrf.mxu0
        %1162 = vmatprep.mubr.f32.mxu0 0.0
        %1163 = vmatmul.mubr.f32.gmra.mxu0 %v1027
        %v1164 = vpop.f32.mrf.mxu0
        %v1165 = vadd.f32 0.0, %v1164
        %v1166 = vpop.f32.mrf.mxu0
        %1167 = vmatprep.mubr.f32.mxu0 0.0
        %1168 = vmatmul.mubr.f32.gmra.mxu0 %v1030
        %v1169 = vpop.f32.mrf.mxu0
        %v1170 = vadd.f32 0.0, %v1169
        %v1171 = vpop.f32.mrf.mxu0
        %1172 = vmatprep.mubr.f32.mxu0 0.0
        %1173 = vmatmul.mubr.f32.gmra.mxu0 %v1033
        %v1174 = vpop.f32.mrf.mxu0
        %v1175 = vadd.f32 0.0, %v1174
        %v1176 = vpop.f32.mrf.mxu0
        %1177 = vmatprep.mubr.f32.mxu0 0.0
        %1178 = vmatmul.mubr.f32.gmra.mxu0 %v1036
        %v1179 = vpop.f32.mrf.mxu0
        %v1180 = vadd.f32 0.0, %v1179
        %v1181 = vpop.f32.mrf.mxu0
        %1182 = vdwg.mxu0
        %1183 = vmax.xlane.f32.xlu0 %v1105
        %v1184 = vpop.xlane.xlu0 %1183
        %1185 = vmax.xlane.f32.xlu0 %v1110
        %v1186 = vpop.xlane.xlu0 %1185
        %1187 = vmax.xlane.f32.xlu0 %v1115
        %v1188 = vpop.xlane.xlu0 %1187
        %1189 = vmax.xlane.f32.xlu0 %v1120
        %v1190 = vpop.xlane.xlu0 %1189
        %1191 = vmax.xlane.f32.xlu0 %v1125
        %v1192 = vpop.xlane.xlu0 %1191
        %1193 = vmax.xlane.f32.xlu0 %v1130
        %v1194 = vpop.xlane.xlu0 %1193
        %1195 = vmax.xlane.f32.xlu0 %v1135
        %v1196 = vpop.xlane.xlu0 %1195
        %1197 = vmax.xlane.f32.xlu0 %v1140
        %v1198 = vpop.xlane.xlu0 %1197
        %1199 = vmax.xlane.f32.xlu0 %v1145
        %v1200 = vpop.xlane.xlu0 %1199
        %1201 = vmax.xlane.f32.xlu0 %v1150
        %v1202 = vpop.xlane.xlu0 %1201
        %1203 = vmax.xlane.f32.xlu0 %v1155
        %v1204 = vpop.xlane.xlu0 %1203
        %1205 = vmax.xlane.f32.xlu0 %v1160
        %v1206 = vpop.xlane.xlu0 %1205
        %1207 = vmax.xlane.f32.xlu0 %v1165
        %v1208 = vpop.xlane.xlu0 %1207
        %1209 = vmax.xlane.f32.xlu0 %v1170
        %v1210 = vpop.xlane.xlu0 %1209
        %1211 = vmax.xlane.f32.xlu0 %v1175
        %v1212 = vpop.xlane.xlu0 %1211
        %1213 = vmax.xlane.f32.xlu0 %v1180
        %v1214 = vpop.xlane.xlu0 %1213
        %v1215 = vsub.f32 %v1105, %v1184
        %v1216 = vsub.f32 %v1110, %v1186
        %v1217 = vsub.f32 %v1115, %v1188
        %v1218 = vsub.f32 %v1120, %v1190
        %v1219 = vsub.f32 %v1125, %v1192
        %v1220 = vsub.f32 %v1130, %v1194
        %v1221 = vsub.f32 %v1135, %v1196
        %v1222 = vsub.f32 %v1140, %v1198
        %v1223 = vsub.f32 %v1145, %v1200
        %v1224 = vsub.f32 %v1150, %v1202
        %v1225 = vsub.f32 %v1155, %v1204
        %v1226 = vsub.f32 %v1160, %v1206
        %v1227 = vsub.f32 %v1165, %v1208
        %v1228 = vsub.f32 %v1170, %v1210
        %v1229 = vsub.f32 %v1175, %v1212
        %v1230 = vsub.f32 %v1180, %v1214
        %v1231 = vmul.f32 %v1215, 1.442695
        %v1232 = vpow.pop %v1231
        %v1233 = vmul.f32 %v1216, 1.442695
        %v1234 = vpow.pop %v1233
        %v1235 = vmul.f32 %v1217, 1.442695
        %v1236 = vpow.pop %v1235
        %v1237 = vmul.f32 %v1218, 1.442695
        %v1238 = vpow.pop %v1237
        %v1239 = vmul.f32 %v1219, 1.442695
        %v1240 = vpow.pop %v1239
        %v1241 = vmul.f32 %v1220, 1.442695
        %v1242 = vpow.pop %v1241
        %v1243 = vmul.f32 %v1221, 1.442695
        %v1244 = vpow.pop %v1243
        %v1245 = vmul.f32 %v1222, 1.442695
        %v1246 = vpow.pop %v1245
        %v1247 = vmul.f32 %v1223, 1.442695
        %v1248 = vpow.pop %v1247
        %v1249 = vmul.f32 %v1224, 1.442695
        %v1250 = vpow.pop %v1249
        %v1251 = vmul.f32 %v1225, 1.442695
        %v1252 = vpow.pop %v1251
        %v1253 = vmul.f32 %v1226, 1.442695
        %v1254 = vpow.pop %v1253
        %v1255 = vmul.f32 %v1227, 1.442695
        %v1256 = vpow.pop %v1255
        %v1257 = vmul.f32 %v1228, 1.442695
        %v1258 = vpow.pop %v1257
        %v1259 = vmul.f32 %v1229, 1.442695
        %v1260 = vpow.pop %v1259
        %v1261 = vmul.f32 %v1230, 1.442695
        %v1262 = vpow.pop %v1261
        %1263 = vadd.xlane.f32.xlu0 %v1232
        %v1264 = vpop.xlane.xlu0 %1263
        %1265 = vadd.xlane.f32.xlu0 %v1234
        %v1266 = vpop.xlane.xlu0 %1265
        %1267 = vadd.xlane.f32.xlu0 %v1236
        %v1268 = vpop.xlane.xlu0 %1267
        %1269 = vadd.xlane.f32.xlu0 %v1238
        %v1270 = vpop.xlane.xlu0 %1269
        %1271 = vadd.xlane.f32.xlu0 %v1240
        %v1272 = vpop.xlane.xlu0 %1271
        %1273 = vadd.xlane.f32.xlu0 %v1242
        %v1274 = vpop.xlane.xlu0 %1273
        %1275 = vadd.xlane.f32.xlu0 %v1244
        %v1276 = vpop.xlane.xlu0 %1275
        %1277 = vadd.xlane.f32.xlu0 %v1246
        %v1278 = vpop.xlane.xlu0 %1277
        %1279 = vadd.xlane.f32.xlu0 %v1248
        %v1280 = vpop.xlane.xlu0 %1279
        %1281 = vadd.xlane.f32.xlu0 %v1250
        %v1282 = vpop.xlane.xlu0 %1281
        %1283 = vadd.xlane.f32.xlu0 %v1252
        %v1284 = vpop.xlane.xlu0 %1283
        %1285 = vadd.xlane.f32.xlu0 %v1254
        %v1286 = vpop.xlane.xlu0 %1285
        %1287 = vadd.xlane.f32.xlu0 %v1256
        %v1288 = vpop.xlane.xlu0 %1287
        %1289 = vadd.xlane.f32.xlu0 %v1258
        %v1290 = vpop.xlane.xlu0 %1289
        %1291 = vadd.xlane.f32.xlu0 %v1260
        %v1292 = vpop.xlane.xlu0 %1291
        %1293 = vadd.xlane.f32.xlu0 %v1262
        %v1294 = vpop.xlane.xlu0 %1293
        %v1295 = vrcp.pop %v1264
        %v1296 = vrcp.pop %v1266
        %v1297 = vrcp.pop %v1268
        %v1298 = vrcp.pop %v1270
        %v1299 = vrcp.pop %v1272
        %v1300 = vrcp.pop %v1274
        %v1301 = vrcp.pop %v1276
        %v1302 = vrcp.pop %v1278
        %v1303 = vrcp.pop %v1280
        %v1304 = vrcp.pop %v1282
        %v1305 = vrcp.pop %v1284
        %v1306 = vrcp.pop %v1286
        %v1307 = vrcp.pop %v1288
        %v1308 = vrcp.pop %v1290
        %v1309 = vrcp.pop %v1292
        %v1310 = vrcp.pop %v1294
        %v1311 = vmul.f32 %v1264, %v1295
        %v1312 = vmul.f32 %v1266, %v1296
        %v1313 = vmul.f32 %v1268, %v1297
        %v1314 = vmul.f32 %v1270, %v1298
        %v1315 = vmul.f32 %v1272, %v1299
        %v1316 = vmul.f32 %v1274, %v1300
        %v1317 = vmul.f32 %v1276, %v1301
        %v1318 = vmul.f32 %v1278, %v1302
        %v1319 = vmul.f32 %v1280, %v1303
        %v1320 = vmul.f32 %v1282, %v1304
        %v1321 = vmul.f32 %v1284, %v1305
        %v1322 = vmul.f32 %v1286, %v1306
        %v1323 = vmul.f32 %v1288, %v1307
        %v1324 = vmul.f32 %v1290, %v1308
        %v1325 = vmul.f32 %v1292, %v1309
        %v1326 = vmul.f32 %v1294, %v1310
        %v1327 = vsub.f32 2.0, %v1311
        %v1328 = vsub.f32 2.0, %v1312
        %v1329 = vsub.f32 2.0, %v1313
        %v1330 = vsub.f32 2.0, %v1314
        %v1331 = vsub.f32 2.0, %v1315
        %v1332 = vsub.f32 2.0, %v1316
        %v1333 = vsub.f32 2.0, %v1317
        %v1334 = vsub.f32 2.0, %v1318
        %v1335 = vsub.f32 2.0, %v1319
        %v1336 = vsub.f32 2.0, %v1320
        %v1337 = vsub.f32 2.0, %v1321
        %v1338 = vsub.f32 2.0, %v1322
        %v1339 = vsub.f32 2.0, %v1323
        %v1340 = vsub.f32 2.0, %v1324
        %v1341 = vsub.f32 2.0, %v1325
        %v1342 = vsub.f32 2.0, %v1326
        %v1343 = vmul.f32 %v1295, %v1327
        %v1344 = vmul.f32 %v1296, %v1328
        %v1345 = vmul.f32 %v1297, %v1329
        %v1346 = vmul.f32 %v1298, %v1330
        %v1347 = vmul.f32 %v1299, %v1331
        %v1348 = vmul.f32 %v1300, %v1332
        %v1349 = vmul.f32 %v1301, %v1333
        %v1350 = vmul.f32 %v1302, %v1334
        %v1351 = vmul.f32 %v1303, %v1335
        %v1352 = vmul.f32 %v1304, %v1336
        %v1353 = vmul.f32 %v1305, %v1337
        %v1354 = vmul.f32 %v1306, %v1338
        %v1355 = vmul.f32 %v1307, %v1339
        %v1356 = vmul.f32 %v1308, %v1340
        %v1357 = vmul.f32 %v1309, %v1341
        %v1358 = vmul.f32 %v1310, %v1342
        %v1359 = vmul.f32 %v1232, %v1343
        %v1360 = vmul.f32 %v1234, %v1344
        %v1361 = vmul.f32 %v1236, %v1345
        %v1362 = vmul.f32 %v1238, %v1346
        %v1363 = vmul.f32 %v1240, %v1347
        %v1364 = vmul.f32 %v1242, %v1348
        %v1365 = vmul.f32 %v1244, %v1349
        %v1366 = vmul.f32 %v1246, %v1350
        %v1367 = vmul.f32 %v1248, %v1351
        %v1368 = vmul.f32 %v1250, %v1352
        %v1369 = vmul.f32 %v1252, %v1353
        %v1370 = vmul.f32 %v1254, %v1354
        %v1371 = vmul.f32 %v1256, %v1355
        %v1372 = vmul.f32 %v1258, %v1356
        %v1373 = vmul.f32 %v1260, %v1357
        %v1374 = vmul.f32 %v1262, %v1358
        %1375 = vmatprep.subr.mxu0 0.0
        %1376 = vmatpush1.xpose.msra.mxu0 %v1374
        %1377 = vmatprep.subr.mxu0 0.0
        %1378 = vmatpush1.xpose.msra.mxu0 %v1373
        %1379 = vmatprep.subr.mxu0 0.0
        %1380 = vmatpush1.xpose.msra.mxu0 %v1372
        %1381 = vmatprep.subr.mxu0 0.0
        %1382 = vmatpush1.xpose.msra.mxu0 %v1371
        %1383 = vmatprep.subr.mxu0 0.0
        %1384 = vmatpush1.xpose.msra.mxu0 %v1370
        %1385 = vmatprep.subr.mxu0 0.0
        %1386 = vmatpush1.xpose.msra.mxu0 %v1369
        %1387 = vmatprep.subr.mxu0 0.0
        %1388 = vmatpush1.xpose.msra.mxu0 %v1368
        %1389 = vmatprep.subr.mxu0 0.0
        %1390 = vmatpush1.xpose.msra.mxu0 %v1367
        %1391 = vmatprep.subr.mxu0 0.0
        %1392 = vmatpush1.xpose.msra.mxu0 %v1366
        %1393 = vmatprep.subr.mxu0 0.0
        %1394 = vmatpush1.xpose.msra.mxu0 %v1365
        %1395 = vmatprep.subr.mxu0 0.0
        %1396 = vmatpush1.xpose.msra.mxu0 %v1364
        %1397 = vmatprep.subr.mxu0 0.0
        %1398 = vmatpush1.xpose.msra.mxu0 %v1363
        %1399 = vmatprep.subr.mxu0 0.0
        %1400 = vmatpush1.xpose.msra.mxu0 %v1362
        %1401 = vmatprep.subr.mxu0 0.0
        %1402 = vmatpush1.xpose.msra.mxu0 %v1361
        %1403 = vmatprep.subr.mxu0 0.0
        %1404 = vmatpush1.xpose.msra.mxu0 %v1360
        %1405 = vmatprep.subr.mxu0 0.0
        %1406 = vmatpush1.xpose.msra.mxu0 %v1359
        %1407 = vmatprep.subr.mxu0 0.0
        %1408 = vmatpush2.xpose.msra.mxu0 0.0
        %1409 = vmatprep.subr.mxu0 0.0
        %1410 = vmatpush2.xpose.msra.mxu0 0.0
        %1411 = vmatprep.subr.mxu0 0.0
        %1412 = vmatpush2.xpose.msra.mxu0 0.0
        %1413 = vmatprep.subr.mxu0 0.0
        %1414 = vmatpush2.xpose.msra.mxu0 0.0
        %1415 = vmatprep.subr.mxu0 0.0
        %1416 = vmatpush2.xpose.msra.mxu0 0.0
        %1417 = vmatprep.subr.mxu0 0.0
        %1418 = vmatpush2.xpose.msra.mxu0 0.0
        %1419 = vmatprep.subr.mxu0 0.0
        %1420 = vmatpush2.xpose.msra.mxu0 0.0
        %1421 = vmatprep.subr.mxu0 0.0
        %1422 = vmatpush2.xpose.msra.mxu0 0.0
        %1423 = vmatprep.subr.mxu0 0.0
        %1424 = vmatpush2.xpose.msra.mxu0 0.0
        %1425 = vmatprep.subr.mxu0 0.0
        %1426 = vmatpush2.xpose.msra.mxu0 0.0
        %1427 = vmatprep.subr.mxu0 0.0
        %1428 = vmatpush2.xpose.msra.mxu0 0.0
        %1429 = vmatprep.subr.mxu0 0.0
        %1430 = vmatpush2.xpose.msra.mxu0 0.0
        %1431 = vmatprep.subr.mxu0 0.0
        %1432 = vmatpush2.xpose.msra.mxu0 0.0
        %1433 = vmatprep.subr.mxu0 0.0
        %1434 = vmatpush2.xpose.msra.mxu0 0.0
        %1435 = vmatprep.subr.mxu0 0.0
        %1436 = vmatpush2.xpose.msra.mxu0 0.0
        %1437 = vmatprep.subr.mxu0 0.0
        %1438 = vmatpush2.xpose.msra.mxu0 0.0
        %1439 = vmatprep.mubr.f32.mxu0 0.0
        %1440 = vmatmul.mubr.f32.gmra.mxu0 %v464
        %v1441 = vpop.f32.mrf.mxu0
        %v1442 = vadd.f32 0.0, %v1441
        %v1443 = vpop.f32.mrf.mxu0
        %1444 = vmatprep.mubr.f32.mxu0 0.0
        %1445 = vmatmul.mubr.f32.gmra.mxu0 %v469
        %v1446 = vpop.f32.mrf.mxu0
        %v1447 = vadd.f32 0.0, %v1446
        %v1448 = vpop.f32.mrf.mxu0
        %1449 = vdwg.mxu0
        %1450 = vmatprep.subr.mxu0 0.0
        %1451 = vmatpush1.xpose.msra.mxu0 %v957
        %1452 = vmatprep.subr.mxu0 0.0
        %1453 = vmatpush1.xpose.msra.mxu0 %v956
        %1454 = vmatprep.subr.mxu0 0.0
        %1455 = vmatpush1.xpose.msra.mxu0 %v955
        %1456 = vmatprep.subr.mxu0 0.0
        %1457 = vmatpush1.xpose.msra.mxu0 %v954
        %1458 = vmatprep.subr.mxu0 0.0
        %1459 = vmatpush1.xpose.msra.mxu0 %v953
        %1460 = vmatprep.subr.mxu0 0.0
        %1461 = vmatpush1.xpose.msra.mxu0 %v952
        %1462 = vmatprep.subr.mxu0 0.0
        %1463 = vmatpush1.xpose.msra.mxu0 %v951
        %1464 = vmatprep.subr.mxu0 0.0
        %1465 = vmatpush1.xpose.msra.mxu0 %v950
        %1466 = vmatprep.subr.mxu0 0.0
        %1467 = vmatpush1.xpose.msra.mxu0 %v949
        %1468 = vmatprep.subr.mxu0 0.0
        %1469 = vmatpush1.xpose.msra.mxu0 %v948
        %1470 = vmatprep.subr.mxu0 0.0
        %1471 = vmatpush1.xpose.msra.mxu0 %v947
        %1472 = vmatprep.subr.mxu0 0.0
        %1473 = vmatpush1.xpose.msra.mxu0 %v946
        %1474 = vmatprep.subr.mxu0 0.0
        %1475 = vmatpush1.xpose.msra.mxu0 %v945
        %1476 = vmatprep.subr.mxu0 0.0
        %1477 = vmatpush1.xpose.msra.mxu0 %v944
        %1478 = vmatprep.subr.mxu0 0.0
        %1479 = vmatpush1.xpose.msra.mxu0 %v943
        %1480 = vmatprep.subr.mxu0 0.0
        %1481 = vmatpush1.xpose.msra.mxu0 %v942
        %1482 = vmatprep.subr.mxu0 0.0
        %1483 = vmatpush2.xpose.msra.mxu0 0.0
        %1484 = vmatprep.subr.mxu0 0.0
        %1485 = vmatpush2.xpose.msra.mxu0 0.0
        %1486 = vmatprep.subr.mxu0 0.0
        %1487 = vmatpush2.xpose.msra.mxu0 0.0
        %1488 = vmatprep.subr.mxu0 0.0
        %1489 = vmatpush2.xpose.msra.mxu0 0.0
        %1490 = vmatprep.subr.mxu0 0.0
        %1491 = vmatpush2.xpose.msra.mxu0 0.0
        %1492 = vmatprep.subr.mxu0 0.0
        %1493 = vmatpush2.xpose.msra.mxu0 0.0
        %1494 = vmatprep.subr.mxu0 0.0
        %1495 = vmatpush2.xpose.msra.mxu0 0.0
        %1496 = vmatprep.subr.mxu0 0.0
        %1497 = vmatpush2.xpose.msra.mxu0 0.0
        %1498 = vmatprep.subr.mxu0 0.0
        %1499 = vmatpush2.xpose.msra.mxu0 0.0
        %1500 = vmatprep.subr.mxu0 0.0
        %1501 = vmatpush2.xpose.msra.mxu0 0.0
        %1502 = vmatprep.subr.mxu0 0.0
        %1503 = vmatpush2.xpose.msra.mxu0 0.0
        %1504 = vmatprep.subr.mxu0 0.0
        %1505 = vmatpush2.xpose.msra.mxu0 0.0
        %1506 = vmatprep.subr.mxu0 0.0
        %1507 = vmatpush2.xpose.msra.mxu0 0.0
        %1508 = vmatprep.subr.mxu0 0.0
        %1509 = vmatpush2.xpose.msra.mxu0 0.0
        %1510 = vmatprep.subr.mxu0 0.0
        %1511 = vmatpush2.xpose.msra.mxu0 0.0
        %1512 = vmatprep.subr.mxu0 0.0
        %1513 = vmatpush2.xpose.msra.mxu0 0.0
        %1514 = vmatprep.mubr.f32.mxu0 0.0
        %1515 = vmatmul.mubr.f32.gmra.mxu0 %v454
        %v1516 = vpop.f32.mrf.mxu0
        %v1517 = vadd.f32 %v1442, %v1516
        %v1518 = vpop.f32.mrf.mxu0
        %1519 = vmatprep.mubr.f32.mxu0 0.0
        %1520 = vmatmul.mubr.f32.gmra.mxu0 %v459
        %v1521 = vpop.f32.mrf.mxu0
        %v1522 = vadd.f32 %v1447, %v1521
        %v1523 = vpop.f32.mrf.mxu0
        %1524 = vdwg.mxu0
        %1525 = vxpose.xlu0.b32.start [1/16] %v514, 128
        %1526 = vxpose.xlu0.b32.cont [2/16] 0.0, 128
        %1527 = vxpose.xlu0.b32.cont [3/16] 0.0, 128
        %1528 = vxpose.xlu0.b32.cont [4/16] 0.0, 128
        %1529 = vxpose.xlu0.b32.cont [5/16] 0.0, 128
        %1530 = vxpose.xlu0.b32.cont [6/16] 0.0, 128
        %1531 = vxpose.xlu0.b32.cont [7/16] 0.0, 128
        %1532 = vxpose.xlu0.b32.cont [8/16] 0.0, 128
        %1533 = vxpose.xlu0.b32.cont [9/16] 0.0, 128
        %1534 = vxpose.xlu0.b32.cont [10/16] 0.0, 128
        %1535 = vxpose.xlu0.b32.cont [11/16] 0.0, 128
        %1536 = vxpose.xlu0.b32.cont [12/16] 0.0, 128
        %1537 = vxpose.xlu0.b32.cont [13/16] 0.0, 128
        %1538 = vxpose.xlu0.b32.cont [14/16] 0.0, 128
        %1539 = vxpose.xlu0.b32.cont [15/16] 0.0, 128
        %1540 = vxpose.xlu0.b32.end [16/16] 0.0, 128
        %v1541 = vpop.trf.xlu0
        %v1542 = vpop.trf.xlu0
        %v1543 = vpop.trf.xlu0
        %v1544 = vpop.trf.xlu0
        %v1545 = vpop.trf.xlu0
        %v1546 = vpop.trf.xlu0
        %v1547 = vpop.trf.xlu0
        %v1548 = vpop.trf.xlu0
        %v1549 = vpop.trf.xlu0
        %v1550 = vpop.trf.xlu0
        %v1551 = vpop.trf.xlu0
        %v1552 = vpop.trf.xlu0
        %v1553 = vpop.trf.xlu0
        %v1554 = vpop.trf.xlu0
        %v1555 = vpop.trf.xlu0
        %v1556 = vpop.trf.xlu0
        %v1558 = vsel %vm572, %v1541, 0
        %v1561 = vsel %vm572, %v1542, 0
        %v1564 = vsel %vm572, %v1543, 0
        %v1567 = vsel %vm572, %v1544, 0
        %v1570 = vsel %vm572, %v1545, 0
        %v1573 = vsel %vm572, %v1546, 0
        %v1576 = vsel %vm572, %v1547, 0
        %v1579 = vsel %vm572, %v1548, 0
        %v1582 = vsel %vm572, %v1549, 0
        %v1585 = vsel %vm572, %v1550, 0
        %v1588 = vsel %vm572, %v1551, 0
        %v1591 = vsel %vm572, %v1552, 0
        %v1594 = vsel %vm572, %v1553, 0
        %v1597 = vsel %vm572, %v1554, 0
        %v1600 = vsel %vm572, %v1555, 0
        %v1603 = vsel %vm572, %v1556, 0
        %1605 = vmatprep.subr.mxu0 0.0
        %1606 = vmatpush1.msra.mxu0 0.0
        %1607 = vmatprep.subr.mxu0 0.0
        %1608 = vmatpush1.msra.mxu0 0.0
        %1609 = vmatprep.subr.mxu0 0.0
        %1610 = vmatpush1.msra.mxu0 0.0
        %1611 = vmatprep.subr.mxu0 0.0
        %1612 = vmatpush1.msra.mxu0 0.0
        %1613 = vmatprep.subr.mxu0 0.0
        %1614 = vmatpush1.msra.mxu0 0.0
        %1615 = vmatprep.subr.mxu0 0.0
        %1616 = vmatpush1.msra.mxu0 0.0
        %1617 = vmatprep.subr.mxu0 0.0
        %1618 = vmatpush1.msra.mxu0 0.0
        %1619 = vmatprep.subr.mxu0 0.0
        %1620 = vmatpush1.msra.mxu0 0.0
        %1621 = vmatprep.subr.mxu0 0.0
        %1622 = vmatpush1.msra.mxu0 0.0
        %1623 = vmatprep.subr.mxu0 0.0
        %1624 = vmatpush1.msra.mxu0 0.0
        %1625 = vmatprep.subr.mxu0 0.0
        %1626 = vmatpush1.msra.mxu0 0.0
        %1627 = vmatprep.subr.mxu0 0.0
        %1628 = vmatpush1.msra.mxu0 0.0
        %1629 = vmatprep.subr.mxu0 0.0
        %1630 = vmatpush1.msra.mxu0 0.0
        %1631 = vmatprep.subr.mxu0 0.0
        %1632 = vmatpush1.msra.mxu0 0.0
        %1633 = vmatprep.subr.mxu0 0.0
        %1634 = vmatpush1.msra.mxu0 0.0
        %1635 = vmatprep.subr.mxu0 0.0
        %1636 = vmatpush1.msra.mxu0 %v538
        %1637 = vmatprep.subr.mxu0 0.0
        %1638 = vmatpush2.msra.mxu0 0.0
        %1639 = vmatprep.subr.mxu0 0.0
        %1640 = vmatpush2.msra.mxu0 0.0
        %1641 = vmatprep.subr.mxu0 0.0
        %1642 = vmatpush2.msra.mxu0 0.0
        %1643 = vmatprep.subr.mxu0 0.0
        %1644 = vmatpush2.msra.mxu0 0.0
        %1645 = vmatprep.subr.mxu0 0.0
        %1646 = vmatpush2.msra.mxu0 0.0
        %1647 = vmatprep.subr.mxu0 0.0
        %1648 = vmatpush2.msra.mxu0 0.0
        %1649 = vmatprep.subr.mxu0 0.0
        %1650 = vmatpush2.msra.mxu0 0.0
        %1651 = vmatprep.subr.mxu0 0.0
        %1652 = vmatpush2.msra.mxu0 0.0
        %1653 = vmatprep.subr.mxu0 0.0
        %1654 = vmatpush2.msra.mxu0 0.0
        %1655 = vmatprep.subr.mxu0 0.0
        %1656 = vmatpush2.msra.mxu0 0.0
        %1657 = vmatprep.subr.mxu0 0.0
        %1658 = vmatpush2.msra.mxu0 0.0
        %1659 = vmatprep.subr.mxu0 0.0
        %1660 = vmatpush2.msra.mxu0 0.0
        %1661 = vmatprep.subr.mxu0 0.0
        %1662 = vmatpush2.msra.mxu0 0.0
        %1663 = vmatprep.subr.mxu0 0.0
        %1664 = vmatpush2.msra.mxu0 0.0
        %1665 = vmatprep.subr.mxu0 0.0
        %1666 = vmatpush2.msra.mxu0 0.0
        %1667 = vmatprep.subr.mxu0 0.0
        %1668 = vmatpush2.msra.mxu0 0.0
        %1669 = vmatprep.mubr.f32.mxu0 0.0
        %1670 = vmatmul.mubr.f32.gmra.mxu0 %v1558
        %v1671 = vpop.f32.mrf.mxu0
        %v1672 = vadd.f32 0.0, %v1671
        %v1673 = vpop.f32.mrf.mxu0
        %1674 = vmatprep.mubr.f32.mxu0 0.0
        %1675 = vmatmul.mubr.f32.gmra.mxu0 %v1561
        %v1676 = vpop.f32.mrf.mxu0
        %v1677 = vadd.f32 0.0, %v1676
        %v1678 = vpop.f32.mrf.mxu0
        %1679 = vmatprep.mubr.f32.mxu0 0.0
        %1680 = vmatmul.mubr.f32.gmra.mxu0 %v1564
        %v1681 = vpop.f32.mrf.mxu0
        %v1682 = vadd.f32 0.0, %v1681
        %v1683 = vpop.f32.mrf.mxu0
        %1684 = vmatprep.mubr.f32.mxu0 0.0
        %1685 = vmatmul.mubr.f32.gmra.mxu0 %v1567
        %v1686 = vpop.f32.mrf.mxu0
        %v1687 = vadd.f32 0.0, %v1686
        %v1688 = vpop.f32.mrf.mxu0
        %1689 = vmatprep.mubr.f32.mxu0 0.0
        %1690 = vmatmul.mubr.f32.gmra.mxu0 %v1570
        %v1691 = vpop.f32.mrf.mxu0
        %v1692 = vadd.f32 0.0, %v1691
        %v1693 = vpop.f32.mrf.mxu0
        %1694 = vmatprep.mubr.f32.mxu0 0.0
        %1695 = vmatmul.mubr.f32.gmra.mxu0 %v1573
        %v1696 = vpop.f32.mrf.mxu0
        %v1697 = vadd.f32 0.0, %v1696
        %v1698 = vpop.f32.mrf.mxu0
        %1699 = vmatprep.mubr.f32.mxu0 0.0
        %1700 = vmatmul.mubr.f32.gmra.mxu0 %v1576
        %v1701 = vpop.f32.mrf.mxu0
        %v1702 = vadd.f32 0.0, %v1701
        %v1703 = vpop.f32.mrf.mxu0
        %1704 = vmatprep.mubr.f32.mxu0 0.0
        %1705 = vmatmul.mubr.f32.gmra.mxu0 %v1579
        %v1706 = vpop.f32.mrf.mxu0
        %v1707 = vadd.f32 0.0, %v1706
        %v1708 = vpop.f32.mrf.mxu0
        %1709 = vmatprep.mubr.f32.mxu0 0.0
        %1710 = vmatmul.mubr.f32.gmra.mxu0 %v1582
        %v1711 = vpop.f32.mrf.mxu0
        %v1712 = vadd.f32 0.0, %v1711
        %v1713 = vpop.f32.mrf.mxu0
        %1714 = vmatprep.mubr.f32.mxu0 0.0
        %1715 = vmatmul.mubr.f32.gmra.mxu0 %v1585
        %v1716 = vpop.f32.mrf.mxu0
        %v1717 = vadd.f32 0.0, %v1716
        %v1718 = vpop.f32.mrf.mxu0
        %1719 = vmatprep.mubr.f32.mxu0 0.0
        %1720 = vmatmul.mubr.f32.gmra.mxu0 %v1588
        %v1721 = vpop.f32.mrf.mxu0
        %v1722 = vadd.f32 0.0, %v1721
        %v1723 = vpop.f32.mrf.mxu0
        %1724 = vmatprep.mubr.f32.mxu0 0.0
        %1725 = vmatmul.mubr.f32.gmra.mxu0 %v1591
        %v1726 = vpop.f32.mrf.mxu0
        %v1727 = vadd.f32 0.0, %v1726
        %v1728 = vpop.f32.mrf.mxu0
        %1729 = vmatprep.mubr.f32.mxu0 0.0
        %1730 = vmatmul.mubr.f32.gmra.mxu0 %v1594
        %v1731 = vpop.f32.mrf.mxu0
        %v1732 = vadd.f32 0.0, %v1731
        %v1733 = vpop.f32.mrf.mxu0
        %1734 = vmatprep.mubr.f32.mxu0 0.0
        %1735 = vmatmul.mubr.f32.gmra.mxu0 %v1597
        %v1736 = vpop.f32.mrf.mxu0
        %v1737 = vadd.f32 0.0, %v1736
        %v1738 = vpop.f32.mrf.mxu0
        %1739 = vmatprep.mubr.f32.mxu0 0.0
        %1740 = vmatmul.mubr.f32.gmra.mxu0 %v1600
        %v1741 = vpop.f32.mrf.mxu0
        %v1742 = vadd.f32 0.0, %v1741
        %v1743 = vpop.f32.mrf.mxu0
        %1744 = vmatprep.mubr.f32.mxu0 0.0
        %1745 = vmatmul.mubr.f32.gmra.mxu0 %v1603
        %v1746 = vpop.f32.mrf.mxu0
        %v1747 = vadd.f32 0.0, %v1746
        %v1748 = vpop.f32.mrf.mxu0
        %1749 = vdwg.mxu0
        %1750 = vmax.xlane.f32.xlu0 %v1672
        %v1751 = vpop.xlane.xlu0 %1750
        %1752 = vmax.xlane.f32.xlu0 %v1677
        %v1753 = vpop.xlane.xlu0 %1752
        %1754 = vmax.xlane.f32.xlu0 %v1682
        %v1755 = vpop.xlane.xlu0 %1754
        %1756 = vmax.xlane.f32.xlu0 %v1687
        %v1757 = vpop.xlane.xlu0 %1756
        %1758 = vmax.xlane.f32.xlu0 %v1692
        %v1759 = vpop.xlane.xlu0 %1758
        %1760 = vmax.xlane.f32.xlu0 %v1697
        %v1761 = vpop.xlane.xlu0 %1760
        %1762 = vmax.xlane.f32.xlu0 %v1702
        %v1763 = vpop.xlane.xlu0 %1762
        %1764 = vmax.xlane.f32.xlu0 %v1707
        %v1765 = vpop.xlane.xlu0 %1764
        %1766 = vmax.xlane.f32.xlu0 %v1712
        %v1767 = vpop.xlane.xlu0 %1766
        %1768 = vmax.xlane.f32.xlu0 %v1717
        %v1769 = vpop.xlane.xlu0 %1768
        %1770 = vmax.xlane.f32.xlu0 %v1722
        %v1771 = vpop.xlane.xlu0 %1770
        %1772 = vmax.xlane.f32.xlu0 %v1727
        %v1773 = vpop.xlane.xlu0 %1772
        %1774 = vmax.xlane.f32.xlu0 %v1732
        %v1775 = vpop.xlane.xlu0 %1774
        %1776 = vmax.xlane.f32.xlu0 %v1737
        %v1777 = vpop.xlane.xlu0 %1776
        %1778 = vmax.xlane.f32.xlu0 %v1742
        %v1779 = vpop.xlane.xlu0 %1778
        %1780 = vmax.xlane.f32.xlu0 %v1747
        %v1781 = vpop.xlane.xlu0 %1780
        %v1782 = vsub.f32 %v1672, %v1751
        %v1783 = vsub.f32 %v1677, %v1753
        %v1784 = vsub.f32 %v1682, %v1755
        %v1785 = vsub.f32 %v1687, %v1757
        %v1786 = vsub.f32 %v1692, %v1759
        %v1787 = vsub.f32 %v1697, %v1761
        %v1788 = vsub.f32 %v1702, %v1763
        %v1789 = vsub.f32 %v1707, %v1765
        %v1790 = vsub.f32 %v1712, %v1767
        %v1791 = vsub.f32 %v1717, %v1769
        %v1792 = vsub.f32 %v1722, %v1771
        %v1793 = vsub.f32 %v1727, %v1773
        %v1794 = vsub.f32 %v1732, %v1775
        %v1795 = vsub.f32 %v1737, %v1777
        %v1796 = vsub.f32 %v1742, %v1779
        %v1797 = vsub.f32 %v1747, %v1781
        %v1798 = vmul.f32 %v1782, 1.442695
        %v1799 = vpow.pop %v1798
        %v1800 = vmul.f32 %v1783, 1.442695
        %v1801 = vpow.pop %v1800
        %v1802 = vmul.f32 %v1784, 1.442695
        %v1803 = vpow.pop %v1802
        %v1804 = vmul.f32 %v1785, 1.442695
        %v1805 = vpow.pop %v1804
        %v1806 = vmul.f32 %v1786, 1.442695
        %v1807 = vpow.pop %v1806
        %v1808 = vmul.f32 %v1787, 1.442695
        %v1809 = vpow.pop %v1808
        %v1810 = vmul.f32 %v1788, 1.442695
        %v1811 = vpow.pop %v1810
        %v1812 = vmul.f32 %v1789, 1.442695
        %v1813 = vpow.pop %v1812
        %v1814 = vmul.f32 %v1790, 1.442695
        %v1815 = vpow.pop %v1814
        %v1816 = vmul.f32 %v1791, 1.442695
        %v1817 = vpow.pop %v1816
        %v1818 = vmul.f32 %v1792, 1.442695
        %v1819 = vpow.pop %v1818
        %v1820 = vmul.f32 %v1793, 1.442695
        %v1821 = vpow.pop %v1820
        %v1822 = vmul.f32 %v1794, 1.442695
        %v1823 = vpow.pop %v1822
        %v1824 = vmul.f32 %v1795, 1.442695
        %v1825 = vpow.pop %v1824
        %v1826 = vmul.f32 %v1796, 1.442695
        %v1827 = vpow.pop %v1826
        %v1828 = vmul.f32 %v1797, 1.442695
        %v1829 = vpow.pop %v1828
        %1830 = vadd.xlane.f32.xlu0 %v1799
        %v1831 = vpop.xlane.xlu0 %1830
        %1832 = vadd.xlane.f32.xlu0 %v1801
        %v1833 = vpop.xlane.xlu0 %1832
        %1834 = vadd.xlane.f32.xlu0 %v1803
        %v1835 = vpop.xlane.xlu0 %1834
        %1836 = vadd.xlane.f32.xlu0 %v1805
        %v1837 = vpop.xlane.xlu0 %1836
        %1838 = vadd.xlane.f32.xlu0 %v1807
        %v1839 = vpop.xlane.xlu0 %1838
        %1840 = vadd.xlane.f32.xlu0 %v1809
        %v1841 = vpop.xlane.xlu0 %1840
        %1842 = vadd.xlane.f32.xlu0 %v1811
        %v1843 = vpop.xlane.xlu0 %1842
        %1844 = vadd.xlane.f32.xlu0 %v1813
        %v1845 = vpop.xlane.xlu0 %1844
        %1846 = vadd.xlane.f32.xlu0 %v1815
        %v1847 = vpop.xlane.xlu0 %1846
        %1848 = vadd.xlane.f32.xlu0 %v1817
        %v1849 = vpop.xlane.xlu0 %1848
        %1850 = vadd.xlane.f32.xlu0 %v1819
        %v1851 = vpop.xlane.xlu0 %1850
        %1852 = vadd.xlane.f32.xlu0 %v1821
        %v1853 = vpop.xlane.xlu0 %1852
        %1854 = vadd.xlane.f32.xlu0 %v1823
        %v1855 = vpop.xlane.xlu0 %1854
        %1856 = vadd.xlane.f32.xlu0 %v1825
        %v1857 = vpop.xlane.xlu0 %1856
        %1858 = vadd.xlane.f32.xlu0 %v1827
        %v1859 = vpop.xlane.xlu0 %1858
        %1860 = vadd.xlane.f32.xlu0 %v1829
        %v1861 = vpop.xlane.xlu0 %1860
        %v1862 = vrcp.pop %v1831
        %v1863 = vrcp.pop %v1833
        %v1864 = vrcp.pop %v1835
        %v1865 = vrcp.pop %v1837
        %v1866 = vrcp.pop %v1839
        %v1867 = vrcp.pop %v1841
        %v1868 = vrcp.pop %v1843
        %v1869 = vrcp.pop %v1845
        %v1870 = vrcp.pop %v1847
        %v1871 = vrcp.pop %v1849
        %v1872 = vrcp.pop %v1851
        %v1873 = vrcp.pop %v1853
        %v1874 = vrcp.pop %v1855
        %v1875 = vrcp.pop %v1857
        %v1876 = vrcp.pop %v1859
        %v1877 = vrcp.pop %v1861
        %v1878 = vmul.f32 %v1831, %v1862
        %v1879 = vmul.f32 %v1833, %v1863
        %v1880 = vmul.f32 %v1835, %v1864
        %v1881 = vmul.f32 %v1837, %v1865
        %v1882 = vmul.f32 %v1839, %v1866
        %v1883 = vmul.f32 %v1841, %v1867
        %v1884 = vmul.f32 %v1843, %v1868
        %v1885 = vmul.f32 %v1845, %v1869
        %v1886 = vmul.f32 %v1847, %v1870
        %v1887 = vmul.f32 %v1849, %v1871
        %v1888 = vmul.f32 %v1851, %v1872
        %v1889 = vmul.f32 %v1853, %v1873
        %v1890 = vmul.f32 %v1855, %v1874
        %v1891 = vmul.f32 %v1857, %v1875
        %v1892 = vmul.f32 %v1859, %v1876
        %v1893 = vmul.f32 %v1861, %v1877
        %v1894 = vsub.f32 2.0, %v1878
        %v1895 = vsub.f32 2.0, %v1879
        %v1896 = vsub.f32 2.0, %v1880
        %v1897 = vsub.f32 2.0, %v1881
        %v1898 = vsub.f32 2.0, %v1882
        %v1899 = vsub.f32 2.0, %v1883
        %v1900 = vsub.f32 2.0, %v1884
        %v1901 = vsub.f32 2.0, %v1885
        %v1902 = vsub.f32 2.0, %v1886
        %v1903 = vsub.f32 2.0, %v1887
        %v1904 = vsub.f32 2.0, %v1888
        %v1905 = vsub.f32 2.0, %v1889
        %v1906 = vsub.f32 2.0, %v1890
        %v1907 = vsub.f32 2.0, %v1891
        %v1908 = vsub.f32 2.0, %v1892
        %v1909 = vsub.f32 2.0, %v1893
        %v1910 = vmul.f32 %v1862, %v1894
        %v1911 = vmul.f32 %v1863, %v1895
        %v1912 = vmul.f32 %v1864, %v1896
        %v1913 = vmul.f32 %v1865, %v1897
        %v1914 = vmul.f32 %v1866, %v1898
        %v1915 = vmul.f32 %v1867, %v1899
        %v1916 = vmul.f32 %v1868, %v1900
        %v1917 = vmul.f32 %v1869, %v1901
        %v1918 = vmul.f32 %v1870, %v1902
        %v1919 = vmul.f32 %v1871, %v1903
        %v1920 = vmul.f32 %v1872, %v1904
        %v1921 = vmul.f32 %v1873, %v1905
        %v1922 = vmul.f32 %v1874, %v1906
        %v1923 = vmul.f32 %v1875, %v1907
        %v1924 = vmul.f32 %v1876, %v1908
        %v1925 = vmul.f32 %v1877, %v1909
        %v1926 = vmul.f32 %v1799, %v1910
        %v1927 = vmul.f32 %v1801, %v1911
        %v1928 = vmul.f32 %v1803, %v1912
        %v1929 = vmul.f32 %v1805, %v1913
        %v1930 = vmul.f32 %v1807, %v1914
        %v1931 = vmul.f32 %v1809, %v1915
        %v1932 = vmul.f32 %v1811, %v1916
        %v1933 = vmul.f32 %v1813, %v1917
        %v1934 = vmul.f32 %v1815, %v1918
        %v1935 = vmul.f32 %v1817, %v1919
        %v1936 = vmul.f32 %v1819, %v1920
        %v1937 = vmul.f32 %v1821, %v1921
        %v1938 = vmul.f32 %v1823, %v1922
        %v1939 = vmul.f32 %v1825, %v1923
        %v1940 = vmul.f32 %v1827, %v1924
        %v1941 = vmul.f32 %v1829, %v1925
        %1942 = vmatprep.subr.mxu0 0.0
        %1943 = vmatpush1.xpose.msra.mxu0 %v1941
        %1944 = vmatprep.subr.mxu0 0.0
        %1945 = vmatpush1.xpose.msra.mxu0 %v1940
        %1946 = vmatprep.subr.mxu0 0.0
        %1947 = vmatpush1.xpose.msra.mxu0 %v1939
        %1948 = vmatprep.subr.mxu0 0.0
        %1949 = vmatpush1.xpose.msra.mxu0 %v1938
        %1950 = vmatprep.subr.mxu0 0.0
        %1951 = vmatpush1.xpose.msra.mxu0 %v1937
        %1952 = vmatprep.subr.mxu0 0.0
        %1953 = vmatpush1.xpose.msra.mxu0 %v1936
        %1954 = vmatprep.subr.mxu0 0.0
        %1955 = vmatpush1.xpose.msra.mxu0 %v1935
        %1956 = vmatprep.subr.mxu0 0.0
        %1957 = vmatpush1.xpose.msra.mxu0 %v1934
        %1958 = vmatprep.subr.mxu0 0.0
        %1959 = vmatpush1.xpose.msra.mxu0 %v1933
        %1960 = vmatprep.subr.mxu0 0.0
        %1961 = vmatpush1.xpose.msra.mxu0 %v1932
        %1962 = vmatprep.subr.mxu0 0.0
        %1963 = vmatpush1.xpose.msra.mxu0 %v1931
        %1964 = vmatprep.subr.mxu0 0.0
        %1965 = vmatpush1.xpose.msra.mxu0 %v1930
        %1966 = vmatprep.subr.mxu0 0.0
        %1967 = vmatpush1.xpose.msra.mxu0 %v1929
        %1968 = vmatprep.subr.mxu0 0.0
        %1969 = vmatpush1.xpose.msra.mxu0 %v1928
        %1970 = vmatprep.subr.mxu0 0.0
        %1971 = vmatpush1.xpose.msra.mxu0 %v1927
        %1972 = vmatprep.subr.mxu0 0.0
        %1973 = vmatpush1.xpose.msra.mxu0 %v1926
        %1974 = vmatprep.subr.mxu0 0.0
        %1975 = vmatpush2.xpose.msra.mxu0 0.0
        %1976 = vmatprep.subr.mxu0 0.0
        %1977 = vmatpush2.xpose.msra.mxu0 0.0
        %1978 = vmatprep.subr.mxu0 0.0
        %1979 = vmatpush2.xpose.msra.mxu0 0.0
        %1980 = vmatprep.subr.mxu0 0.0
        %1981 = vmatpush2.xpose.msra.mxu0 0.0
        %1982 = vmatprep.subr.mxu0 0.0
        %1983 = vmatpush2.xpose.msra.mxu0 0.0
        %1984 = vmatprep.subr.mxu0 0.0
        %1985 = vmatpush2.xpose.msra.mxu0 0.0
        %1986 = vmatprep.subr.mxu0 0.0
        %1987 = vmatpush2.xpose.msra.mxu0 0.0
        %1988 = vmatprep.subr.mxu0 0.0
        %1989 = vmatpush2.xpose.msra.mxu0 0.0
        %1990 = vmatprep.subr.mxu0 0.0
        %1991 = vmatpush2.xpose.msra.mxu0 0.0
        %1992 = vmatprep.subr.mxu0 0.0
        %1993 = vmatpush2.xpose.msra.mxu0 0.0
        %1994 = vmatprep.subr.mxu0 0.0
        %1995 = vmatpush2.xpose.msra.mxu0 0.0
        %1996 = vmatprep.subr.mxu0 0.0
        %1997 = vmatpush2.xpose.msra.mxu0 0.0
        %1998 = vmatprep.subr.mxu0 0.0
        %1999 = vmatpush2.xpose.msra.mxu0 0.0
        %2000 = vmatprep.subr.mxu0 0.0
        %2001 = vmatpush2.xpose.msra.mxu0 0.0
        %2002 = vmatprep.subr.mxu0 0.0
        %2003 = vmatpush2.xpose.msra.mxu0 0.0
        %2004 = vmatprep.subr.mxu0 0.0
        %2005 = vmatpush2.xpose.msra.mxu0 0.0
        %2006 = vmatprep.mubr.f32.mxu0 0.0
        %2007 = vmatmul.mubr.f32.gmra.mxu0 %v474
        %v2008 = vpop.f32.mrf.mxu0
        %v2009 = vadd.f32 0.0, %v2008
        %v2010 = vpop.f32.mrf.mxu0
        %2011 = vmatprep.mubr.f32.mxu0 0.0
        %2012 = vmatmul.mubr.f32.gmra.mxu0 %v479
        %v2013 = vpop.f32.mrf.mxu0
        %v2014 = vadd.f32 0.0, %v2013
        %v2015 = vpop.f32.mrf.mxu0
        %2016 = vdwg.mxu0
        %v2017 = vadd.f32 %v1517, %v2009
        %v2018 = vadd.f32 %v1522, %v2014
        %2019 = vxpose.xlu0.b32.start [1/16] %v515, 128
        %2020 = vxpose.xlu0.b32.cont [2/16] 0.0, 128
        %2021 = vxpose.xlu0.b32.cont [3/16] 0.0, 128
        %2022 = vxpose.xlu0.b32.cont [4/16] 0.0, 128
        %2023 = vxpose.xlu0.b32.cont [5/16] 0.0, 128
        %2024 = vxpose.xlu0.b32.cont [6/16] 0.0, 128
        %2025 = vxpose.xlu0.b32.cont [7/16] 0.0, 128
        %2026 = vxpose.xlu0.b32.cont [8/16] 0.0, 128
        %2027 = vxpose.xlu0.b32.cont [9/16] 0.0, 128
        %2028 = vxpose.xlu0.b32.cont [10/16] 0.0, 128
        %2029 = vxpose.xlu0.b32.cont [11/16] 0.0, 128
        %2030 = vxpose.xlu0.b32.cont [12/16] 0.0, 128
        %2031 = vxpose.xlu0.b32.cont [13/16] 0.0, 128
        %2032 = vxpose.xlu0.b32.cont [14/16] 0.0, 128
        %2033 = vxpose.xlu0.b32.cont [15/16] 0.0, 128
        %2034 = vxpose.xlu0.b32.end [16/16] 0.0, 128
        %v2035 = vpop.trf.xlu0
        %v2036 = vpop.trf.xlu0
        %v2037 = vpop.trf.xlu0
        %v2038 = vpop.trf.xlu0
        %v2039 = vpop.trf.xlu0
        %v2040 = vpop.trf.xlu0
        %v2041 = vpop.trf.xlu0
        %v2042 = vpop.trf.xlu0
        %v2043 = vpop.trf.xlu0
        %v2044 = vpop.trf.xlu0
        %v2045 = vpop.trf.xlu0
        %v2046 = vpop.trf.xlu0
        %v2047 = vpop.trf.xlu0
        %v2048 = vpop.trf.xlu0
        %v2049 = vpop.trf.xlu0
        %v2050 = vpop.trf.xlu0
        %v2052 = vsel %vm572, %v2035, 0
        %v2055 = vsel %vm572, %v2036, 0
        %v2058 = vsel %vm572, %v2037, 0
        %v2061 = vsel %vm572, %v2038, 0
        %v2064 = vsel %vm572, %v2039, 0
        %v2067 = vsel %vm572, %v2040, 0
        %v2070 = vsel %vm572, %v2041, 0
        %v2073 = vsel %vm572, %v2042, 0
        %v2076 = vsel %vm572, %v2043, 0
        %v2079 = vsel %vm572, %v2044, 0
        %v2082 = vsel %vm572, %v2045, 0
        %v2085 = vsel %vm572, %v2046, 0
        %v2088 = vsel %vm572, %v2047, 0
        %v2091 = vsel %vm572, %v2048, 0
        %v2094 = vsel %vm572, %v2049, 0
        %v2097 = vsel %vm572, %v2050, 0
        %2099 = vmatprep.subr.mxu0 0.0
        %2100 = vmatpush1.msra.mxu0 0.0
        %2101 = vmatprep.subr.mxu0 0.0
        %2102 = vmatpush1.msra.mxu0 0.0
        %2103 = vmatprep.subr.mxu0 0.0
        %2104 = vmatpush1.msra.mxu0 0.0
        %2105 = vmatprep.subr.mxu0 0.0
        %2106 = vmatpush1.msra.mxu0 0.0
        %2107 = vmatprep.subr.mxu0 0.0
        %2108 = vmatpush1.msra.mxu0 0.0
        %2109 = vmatprep.subr.mxu0 0.0
        %2110 = vmatpush1.msra.mxu0 0.0
        %2111 = vmatprep.subr.mxu0 0.0
        %2112 = vmatpush1.msra.mxu0 0.0
        %2113 = vmatprep.subr.mxu0 0.0
        %2114 = vmatpush1.msra.mxu0 0.0
        %2115 = vmatprep.subr.mxu0 0.0
        %2116 = vmatpush1.msra.mxu0 0.0
        %2117 = vmatprep.subr.mxu0 0.0
        %2118 = vmatpush1.msra.mxu0 0.0
        %2119 = vmatprep.subr.mxu0 0.0
        %2120 = vmatpush1.msra.mxu0 0.0
        %2121 = vmatprep.subr.mxu0 0.0
        %2122 = vmatpush1.msra.mxu0 0.0
        %2123 = vmatprep.subr.mxu0 0.0
        %2124 = vmatpush1.msra.mxu0 0.0
        %2125 = vmatprep.subr.mxu0 0.0
        %2126 = vmatpush1.msra.mxu0 0.0
        %2127 = vmatprep.subr.mxu0 0.0
        %2128 = vmatpush1.msra.mxu0 0.0
        %2129 = vmatprep.subr.mxu0 0.0
        %2130 = vmatpush1.msra.mxu0 %v539
        %2131 = vmatprep.subr.mxu0 0.0
        %2132 = vmatpush2.msra.mxu0 0.0
        %2133 = vmatprep.subr.mxu0 0.0
        %2134 = vmatpush2.msra.mxu0 0.0
        %2135 = vmatprep.subr.mxu0 0.0
        %2136 = vmatpush2.msra.mxu0 0.0
        %2137 = vmatprep.subr.mxu0 0.0
        %2138 = vmatpush2.msra.mxu0 0.0
        %2139 = vmatprep.subr.mxu0 0.0
        %2140 = vmatpush2.msra.mxu0 0.0
        %2141 = vmatprep.subr.mxu0 0.0
        %2142 = vmatpush2.msra.mxu0 0.0
        %2143 = vmatprep.subr.mxu0 0.0
        %2144 = vmatpush2.msra.mxu0 0.0
        %2145 = vmatprep.subr.mxu0 0.0
        %2146 = vmatpush2.msra.mxu0 0.0
        %2147 = vmatprep.subr.mxu0 0.0
        %2148 = vmatpush2.msra.mxu0 0.0
        %2149 = vmatprep.subr.mxu0 0.0
        %2150 = vmatpush2.msra.mxu0 0.0
        %2151 = vmatprep.subr.mxu0 0.0
        %2152 = vmatpush2.msra.mxu0 0.0
        %2153 = vmatprep.subr.mxu0 0.0
        %2154 = vmatpush2.msra.mxu0 0.0
        %2155 = vmatprep.subr.mxu0 0.0
        %2156 = vmatpush2.msra.mxu0 0.0
        %2157 = vmatprep.subr.mxu0 0.0
        %2158 = vmatpush2.msra.mxu0 0.0
        %2159 = vmatprep.subr.mxu0 0.0
        %2160 = vmatpush2.msra.mxu0 0.0
        %2161 = vmatprep.subr.mxu0 0.0
        %2162 = vmatpush2.msra.mxu0 0.0
        %2163 = vmatprep.mubr.f32.mxu0 0.0
        %2164 = vmatmul.mubr.f32.gmra.mxu0 %v2052
        %v2165 = vpop.f32.mrf.mxu0
        %v2166 = vadd.f32 0.0, %v2165
        %v2167 = vpop.f32.mrf.mxu0
        %2168 = vmatprep.mubr.f32.mxu0 0.0
        %2169 = vmatmul.mubr.f32.gmra.mxu0 %v2055
        %v2170 = vpop.f32.mrf.mxu0
        %v2171 = vadd.f32 0.0, %v2170
        %v2172 = vpop.f32.mrf.mxu0
        %2173 = vmatprep.mubr.f32.mxu0 0.0
        %2174 = vmatmul.mubr.f32.gmra.mxu0 %v2058
        %v2175 = vpop.f32.mrf.mxu0
        %v2176 = vadd.f32 0.0, %v2175
        %v2177 = vpop.f32.mrf.mxu0
        %2178 = vmatprep.mubr.f32.mxu0 0.0
        %2179 = vmatmul.mubr.f32.gmra.mxu0 %v2061
        %v2180 = vpop.f32.mrf.mxu0
        %v2181 = vadd.f32 0.0, %v2180
        %v2182 = vpop.f32.mrf.mxu0
        %2183 = vmatprep.mubr.f32.mxu0 0.0
        %2184 = vmatmul.mubr.f32.gmra.mxu0 %v2064
        %v2185 = vpop.f32.mrf.mxu0
        %v2186 = vadd.f32 0.0, %v2185
        %v2187 = vpop.f32.mrf.mxu0
        %2188 = vmatprep.mubr.f32.mxu0 0.0
        %2189 = vmatmul.mubr.f32.gmra.mxu0 %v2067
        %v2190 = vpop.f32.mrf.mxu0
        %v2191 = vadd.f32 0.0, %v2190
        %v2192 = vpop.f32.mrf.mxu0
        %2193 = vmatprep.mubr.f32.mxu0 0.0
        %2194 = vmatmul.mubr.f32.gmra.mxu0 %v2070
        %v2195 = vpop.f32.mrf.mxu0
        %v2196 = vadd.f32 0.0, %v2195
        %v2197 = vpop.f32.mrf.mxu0
        %2198 = vmatprep.mubr.f32.mxu0 0.0
        %2199 = vmatmul.mubr.f32.gmra.mxu0 %v2073
        %v2200 = vpop.f32.mrf.mxu0
        %v2201 = vadd.f32 0.0, %v2200
        %v2202 = vpop.f32.mrf.mxu0
        %2203 = vmatprep.mubr.f32.mxu0 0.0
        %2204 = vmatmul.mubr.f32.gmra.mxu0 %v2076
        %v2205 = vpop.f32.mrf.mxu0
        %v2206 = vadd.f32 0.0, %v2205
        %v2207 = vpop.f32.mrf.mxu0
        %2208 = vmatprep.mubr.f32.mxu0 0.0
        %2209 = vmatmul.mubr.f32.gmra.mxu0 %v2079
        %v2210 = vpop.f32.mrf.mxu0
        %v2211 = vadd.f32 0.0, %v2210
        %v2212 = vpop.f32.mrf.mxu0
        %2213 = vmatprep.mubr.f32.mxu0 0.0
        %2214 = vmatmul.mubr.f32.gmra.mxu0 %v2082
        %v2215 = vpop.f32.mrf.mxu0
        %v2216 = vadd.f32 0.0, %v2215
        %v2217 = vpop.f32.mrf.mxu0
        %2218 = vmatprep.mubr.f32.mxu0 0.0
        %2219 = vmatmul.mubr.f32.gmra.mxu0 %v2085
        %v2220 = vpop.f32.mrf.mxu0
        %v2221 = vadd.f32 0.0, %v2220
        %v2222 = vpop.f32.mrf.mxu0
        %2223 = vmatprep.mubr.f32.mxu0 0.0
        %2224 = vmatmul.mubr.f32.gmra.mxu0 %v2088
        %v2225 = vpop.f32.mrf.mxu0
        %v2226 = vadd.f32 0.0, %v2225
        %v2227 = vpop.f32.mrf.mxu0
        %2228 = vmatprep.mubr.f32.mxu0 0.0
        %2229 = vmatmul.mubr.f32.gmra.mxu0 %v2091
        %v2230 = vpop.f32.mrf.mxu0
        %v2231 = vadd.f32 0.0, %v2230
        %v2232 = vpop.f32.mrf.mxu0
        %2233 = vmatprep.mubr.f32.mxu0 0.0
        %2234 = vmatmul.mubr.f32.gmra.mxu0 %v2094
        %v2235 = vpop.f32.mrf.mxu0
        %v2236 = vadd.f32 0.0, %v2235
        %v2237 = vpop.f32.mrf.mxu0
        %2238 = vmatprep.mubr.f32.mxu0 0.0
        %2239 = vmatmul.mubr.f32.gmra.mxu0 %v2097
        %v2240 = vpop.f32.mrf.mxu0
        %v2241 = vadd.f32 0.0, %v2240
        %v2242 = vpop.f32.mrf.mxu0
        %2243 = vdwg.mxu0
        %2244 = vmax.xlane.f32.xlu0 %v2166
        %v2245 = vpop.xlane.xlu0 %2244
        %2246 = vmax.xlane.f32.xlu0 %v2171
        %v2247 = vpop.xlane.xlu0 %2246
        %2248 = vmax.xlane.f32.xlu0 %v2176
        %v2249 = vpop.xlane.xlu0 %2248
        %2250 = vmax.xlane.f32.xlu0 %v2181
        %v2251 = vpop.xlane.xlu0 %2250
        %2252 = vmax.xlane.f32.xlu0 %v2186
        %v2253 = vpop.xlane.xlu0 %2252
        %2254 = vmax.xlane.f32.xlu0 %v2191
        %v2255 = vpop.xlane.xlu0 %2254
        %2256 = vmax.xlane.f32.xlu0 %v2196
        %v2257 = vpop.xlane.xlu0 %2256
        %2258 = vmax.xlane.f32.xlu0 %v2201
        %v2259 = vpop.xlane.xlu0 %2258
        %2260 = vmax.xlane.f32.xlu0 %v2206
        %v2261 = vpop.xlane.xlu0 %2260
        %2262 = vmax.xlane.f32.xlu0 %v2211
        %v2263 = vpop.xlane.xlu0 %2262
        %2264 = vmax.xlane.f32.xlu0 %v2216
        %v2265 = vpop.xlane.xlu0 %2264
        %2266 = vmax.xlane.f32.xlu0 %v2221
        %v2267 = vpop.xlane.xlu0 %2266
        %2268 = vmax.xlane.f32.xlu0 %v2226
        %v2269 = vpop.xlane.xlu0 %2268
        %2270 = vmax.xlane.f32.xlu0 %v2231
        %v2271 = vpop.xlane.xlu0 %2270
        %2272 = vmax.xlane.f32.xlu0 %v2236
        %v2273 = vpop.xlane.xlu0 %2272
        %2274 = vmax.xlane.f32.xlu0 %v2241
        %v2275 = vpop.xlane.xlu0 %2274
        %v2276 = vsub.f32 %v2166, %v2245
        %v2277 = vsub.f32 %v2171, %v2247
        %v2278 = vsub.f32 %v2176, %v2249
        %v2279 = vsub.f32 %v2181, %v2251
        %v2280 = vsub.f32 %v2186, %v2253
        %v2281 = vsub.f32 %v2191, %v2255
        %v2282 = vsub.f32 %v2196, %v2257
        %v2283 = vsub.f32 %v2201, %v2259
        %v2284 = vsub.f32 %v2206, %v2261
        %v2285 = vsub.f32 %v2211, %v2263
        %v2286 = vsub.f32 %v2216, %v2265
        %v2287 = vsub.f32 %v2221, %v2267
        %v2288 = vsub.f32 %v2226, %v2269
        %v2289 = vsub.f32 %v2231, %v2271
        %v2290 = vsub.f32 %v2236, %v2273
        %v2291 = vsub.f32 %v2241, %v2275
        %v2292 = vmul.f32 %v2276, 1.442695
        %v2293 = vpow.pop %v2292
        %v2294 = vmul.f32 %v2277, 1.442695
        %v2295 = vpow.pop %v2294
        %v2296 = vmul.f32 %v2278, 1.442695
        %v2297 = vpow.pop %v2296
        %v2298 = vmul.f32 %v2279, 1.442695
        %v2299 = vpow.pop %v2298
        %v2300 = vmul.f32 %v2280, 1.442695
        %v2301 = vpow.pop %v2300
        %v2302 = vmul.f32 %v2281, 1.442695
        %v2303 = vpow.pop %v2302
        %v2304 = vmul.f32 %v2282, 1.442695
        %v2305 = vpow.pop %v2304
        %v2306 = vmul.f32 %v2283, 1.442695
        %v2307 = vpow.pop %v2306
        %v2308 = vmul.f32 %v2284, 1.442695
        %v2309 = vpow.pop %v2308
        %v2310 = vmul.f32 %v2285, 1.442695
        %v2311 = vpow.pop %v2310
        %v2312 = vmul.f32 %v2286, 1.442695
        %v2313 = vpow.pop %v2312
        %v2314 = vmul.f32 %v2287, 1.442695
        %v2315 = vpow.pop %v2314
        %v2316 = vmul.f32 %v2288, 1.442695
        %v2317 = vpow.pop %v2316
        %v2318 = vmul.f32 %v2289, 1.442695
        %v2319 = vpow.pop %v2318
        %v2320 = vmul.f32 %v2290, 1.442695
        %v2321 = vpow.pop %v2320
        %v2322 = vmul.f32 %v2291, 1.442695
        %v2323 = vpow.pop %v2322
        %2324 = vadd.xlane.f32.xlu0 %v2293
        %v2325 = vpop.xlane.xlu0 %2324
        %2326 = vadd.xlane.f32.xlu0 %v2295
        %v2327 = vpop.xlane.xlu0 %2326
        %2328 = vadd.xlane.f32.xlu0 %v2297
        %v2329 = vpop.xlane.xlu0 %2328
        %2330 = vadd.xlane.f32.xlu0 %v2299
        %v2331 = vpop.xlane.xlu0 %2330
        %2332 = vadd.xlane.f32.xlu0 %v2301
        %v2333 = vpop.xlane.xlu0 %2332
        %2334 = vadd.xlane.f32.xlu0 %v2303
        %v2335 = vpop.xlane.xlu0 %2334
        %2336 = vadd.xlane.f32.xlu0 %v2305
        %v2337 = vpop.xlane.xlu0 %2336
        %2338 = vadd.xlane.f32.xlu0 %v2307
        %v2339 = vpop.xlane.xlu0 %2338
        %2340 = vadd.xlane.f32.xlu0 %v2309
        %v2341 = vpop.xlane.xlu0 %2340
        %2342 = vadd.xlane.f32.xlu0 %v2311
        %v2343 = vpop.xlane.xlu0 %2342
        %2344 = vadd.xlane.f32.xlu0 %v2313
        %v2345 = vpop.xlane.xlu0 %2344
        %2346 = vadd.xlane.f32.xlu0 %v2315
        %v2347 = vpop.xlane.xlu0 %2346
        %2348 = vadd.xlane.f32.xlu0 %v2317
        %v2349 = vpop.xlane.xlu0 %2348
        %2350 = vadd.xlane.f32.xlu0 %v2319
        %v2351 = vpop.xlane.xlu0 %2350
        %2352 = vadd.xlane.f32.xlu0 %v2321
        %v2353 = vpop.xlane.xlu0 %2352
        %2354 = vadd.xlane.f32.xlu0 %v2323
        %v2355 = vpop.xlane.xlu0 %2354
        %v2356 = vrcp.pop %v2325
        %v2357 = vrcp.pop %v2327
        %v2358 = vrcp.pop %v2329
        %v2359 = vrcp.pop %v2331
        %v2360 = vrcp.pop %v2333
        %v2361 = vrcp.pop %v2335
        %v2362 = vrcp.pop %v2337
        %v2363 = vrcp.pop %v2339
        %v2364 = vrcp.pop %v2341
        %v2365 = vrcp.pop %v2343
        %v2366 = vrcp.pop %v2345
        %v2367 = vrcp.pop %v2347
        %v2368 = vrcp.pop %v2349
        %v2369 = vrcp.pop %v2351
        %v2370 = vrcp.pop %v2353
        %v2371 = vrcp.pop %v2355
        %v2372 = vmul.f32 %v2325, %v2356
        %v2373 = vmul.f32 %v2327, %v2357
        %v2374 = vmul.f32 %v2329, %v2358
        %v2375 = vmul.f32 %v2331, %v2359
        %v2376 = vmul.f32 %v2333, %v2360
        %v2377 = vmul.f32 %v2335, %v2361
        %v2378 = vmul.f32 %v2337, %v2362
        %v2379 = vmul.f32 %v2339, %v2363
        %v2380 = vmul.f32 %v2341, %v2364
        %v2381 = vmul.f32 %v2343, %v2365
        %v2382 = vmul.f32 %v2345, %v2366
        %v2383 = vmul.f32 %v2347, %v2367
        %v2384 = vmul.f32 %v2349, %v2368
        %v2385 = vmul.f32 %v2351, %v2369
        %v2386 = vmul.f32 %v2353, %v2370
        %v2387 = vmul.f32 %v2355, %v2371
        %v2388 = vsub.f32 2.0, %v2372
        %v2389 = vsub.f32 2.0, %v2373
        %v2390 = vsub.f32 2.0, %v2374
        %v2391 = vsub.f32 2.0, %v2375
        %v2392 = vsub.f32 2.0, %v2376
        %v2393 = vsub.f32 2.0, %v2377
        %v2394 = vsub.f32 2.0, %v2378
        %v2395 = vsub.f32 2.0, %v2379
        %v2396 = vsub.f32 2.0, %v2380
        %v2397 = vsub.f32 2.0, %v2381
        %v2398 = vsub.f32 2.0, %v2382
        %v2399 = vsub.f32 2.0, %v2383
        %v2400 = vsub.f32 2.0, %v2384
        %v2401 = vsub.f32 2.0, %v2385
        %v2402 = vsub.f32 2.0, %v2386
        %v2403 = vsub.f32 2.0, %v2387
        %v2404 = vmul.f32 %v2356, %v2388
        %v2405 = vmul.f32 %v2357, %v2389
        %v2406 = vmul.f32 %v2358, %v2390
        %v2407 = vmul.f32 %v2359, %v2391
        %v2408 = vmul.f32 %v2360, %v2392
        %v2409 = vmul.f32 %v2361, %v2393
        %v2410 = vmul.f32 %v2362, %v2394
        %v2411 = vmul.f32 %v2363, %v2395
        %v2412 = vmul.f32 %v2364, %v2396
        %v2413 = vmul.f32 %v2365, %v2397
        %v2414 = vmul.f32 %v2366, %v2398
        %v2415 = vmul.f32 %v2367, %v2399
        %v2416 = vmul.f32 %v2368, %v2400
        %v2417 = vmul.f32 %v2369, %v2401
        %v2418 = vmul.f32 %v2370, %v2402
        %v2419 = vmul.f32 %v2371, %v2403
        %v2420 = vmul.f32 %v2293, %v2404
        %v2421 = vmul.f32 %v2295, %v2405
        %v2422 = vmul.f32 %v2297, %v2406
        %v2423 = vmul.f32 %v2299, %v2407
        %v2424 = vmul.f32 %v2301, %v2408
        %v2425 = vmul.f32 %v2303, %v2409
        %v2426 = vmul.f32 %v2305, %v2410
        %v2427 = vmul.f32 %v2307, %v2411
        %v2428 = vmul.f32 %v2309, %v2412
        %v2429 = vmul.f32 %v2311, %v2413
        %v2430 = vmul.f32 %v2313, %v2414
        %v2431 = vmul.f32 %v2315, %v2415
        %v2432 = vmul.f32 %v2317, %v2416
        %v2433 = vmul.f32 %v2319, %v2417
        %v2434 = vmul.f32 %v2321, %v2418
        %v2435 = vmul.f32 %v2323, %v2419
        %2436 = vmatprep.subr.mxu0 0.0
        %2437 = vmatpush1.xpose.msra.mxu0 %v2435
        %2438 = vmatprep.subr.mxu0 0.0
        %2439 = vmatpush1.xpose.msra.mxu0 %v2434
        %2440 = vmatprep.subr.mxu0 0.0
        %2441 = vmatpush1.xpose.msra.mxu0 %v2433
        %2442 = vmatprep.subr.mxu0 0.0
        %2443 = vmatpush1.xpose.msra.mxu0 %v2432
        %2444 = vmatprep.subr.mxu0 0.0
        %2445 = vmatpush1.xpose.msra.mxu0 %v2431
        %2446 = vmatprep.subr.mxu0 0.0
        %2447 = vmatpush1.xpose.msra.mxu0 %v2430
        %2448 = vmatprep.subr.mxu0 0.0
        %2449 = vmatpush1.xpose.msra.mxu0 %v2429
        %2450 = vmatprep.subr.mxu0 0.0
        %2451 = vmatpush1.xpose.msra.mxu0 %v2428
        %2452 = vmatprep.subr.mxu0 0.0
        %2453 = vmatpush1.xpose.msra.mxu0 %v2427
        %2454 = vmatprep.subr.mxu0 0.0
        %2455 = vmatpush1.xpose.msra.mxu0 %v2426
        %2456 = vmatprep.subr.mxu0 0.0
        %2457 = vmatpush1.xpose.msra.mxu0 %v2425
        %2458 = vmatprep.subr.mxu0 0.0
        %2459 = vmatpush1.xpose.msra.mxu0 %v2424
        %2460 = vmatprep.subr.mxu0 0.0
        %2461 = vmatpush1.xpose.msra.mxu0 %v2423
        %2462 = vmatprep.subr.mxu0 0.0
        %2463 = vmatpush1.xpose.msra.mxu0 %v2422
        %2464 = vmatprep.subr.mxu0 0.0
        %2465 = vmatpush1.xpose.msra.mxu0 %v2421
        %2466 = vmatprep.subr.mxu0 0.0
        %2467 = vmatpush1.xpose.msra.mxu0 %v2420
        %2468 = vmatprep.subr.mxu0 0.0
        %2469 = vmatpush2.xpose.msra.mxu0 0.0
        %2470 = vmatprep.subr.mxu0 0.0
        %2471 = vmatpush2.xpose.msra.mxu0 0.0
        %2472 = vmatprep.subr.mxu0 0.0
        %2473 = vmatpush2.xpose.msra.mxu0 0.0
        %2474 = vmatprep.subr.mxu0 0.0
        %2475 = vmatpush2.xpose.msra.mxu0 0.0
        %2476 = vmatprep.subr.mxu0 0.0
        %2477 = vmatpush2.xpose.msra.mxu0 0.0
        %2478 = vmatprep.subr.mxu0 0.0
        %2479 = vmatpush2.xpose.msra.mxu0 0.0
        %2480 = vmatprep.subr.mxu0 0.0
        %2481 = vmatpush2.xpose.msra.mxu0 0.0
        %2482 = vmatprep.subr.mxu0 0.0
        %2483 = vmatpush2.xpose.msra.mxu0 0.0
        %2484 = vmatprep.subr.mxu0 0.0
        %2485 = vmatpush2.xpose.msra.mxu0 0.0
        %2486 = vmatprep.subr.mxu0 0.0
        %2487 = vmatpush2.xpose.msra.mxu0 0.0
        %2488 = vmatprep.subr.mxu0 0.0
        %2489 = vmatpush2.xpose.msra.mxu0 0.0
        %2490 = vmatprep.subr.mxu0 0.0
        %2491 = vmatpush2.xpose.msra.mxu0 0.0
        %2492 = vmatprep.subr.mxu0 0.0
        %2493 = vmatpush2.xpose.msra.mxu0 0.0
        %2494 = vmatprep.subr.mxu0 0.0
        %2495 = vmatpush2.xpose.msra.mxu0 0.0
        %2496 = vmatprep.subr.mxu0 0.0
        %2497 = vmatpush2.xpose.msra.mxu0 0.0
        %2498 = vmatprep.subr.mxu0 0.0
        %2499 = vmatpush2.xpose.msra.mxu0 0.0
        %2500 = vmatprep.mubr.f32.mxu0 0.0
        %2501 = vmatmul.mubr.f32.gmra.mxu0 %v484
        %v2502 = vpop.f32.mrf.mxu0
        %v2503 = vadd.f32 0.0, %v2502
        %v2504 = vpop.f32.mrf.mxu0
        %2505 = vmatprep.mubr.f32.mxu0 0.0
        %2506 = vmatmul.mubr.f32.gmra.mxu0 %v489
        %v2507 = vpop.f32.mrf.mxu0
        %v2508 = vadd.f32 0.0, %v2507
        %v2509 = vpop.f32.mrf.mxu0
        %2510 = vdwg.mxu0
        %v2511 = vadd.f32 %v2017, %v2503
        %v2512 = vadd.f32 %v2018, %v2508
        %2514 = vset.pattern.permute.xlu0 0
        %2515 = vperm.xlu0 %2514, %v218
        %v2516 = vpop.permute.xlu0 %2515
        %2519 = vset.pattern.permute.xlu0 0
        %2520 = vperm.xlu0 %2519, %v219
        %v2521 = vpop.permute.xlu0 %2520
        %v2523 = vadd.f32 %v2511, %v2516
        %v2524 = vadd.f32 %v2512, %v2521
        %v2525 = vadd.f32 %v2523, %v2524
        %v2526 = vrot.slane %v2525, 4
        %v2527 = vadd.f32 %v2525, %v2526
        %v2528 = vrot.slane %v2527, 2
        %v2529 = vadd.f32 %v2527, %v2528
        %v2530 = vrot.slane %v2529, 1
        %v2531 = vadd.f32 %v2529, %v2530
        %v2532 = vmul.f32 %v2531, 0.0625
        %v2533 = vsub.f32 %v2523, %v2532
        %v2534 = vsub.f32 %v2524, %v2532
        %v2535 = vmul.f32 %v2533, %v2533
        %v2536 = vmul.f32 %v2534, %v2534
        %v2537 = vadd.f32 %v2535, %v2536
        %v2538 = vrot.slane %v2537, 4
        %v2539 = vadd.f32 %v2537, %v2538
        %v2540 = vrot.slane %v2539, 2
        %v2541 = vadd.f32 %v2539, %v2540
        %v2542 = vrot.slane %v2541, 1
        %v2543 = vadd.f32 %v2541, %v2542
        %v2544 = vmul.f32 %v2543, 0.0625
        %v2545 = vadd.f32 %v2544, 1e-05
        %v2546 = vrsqrt.pop %v2545
        %v2547 = vmul.f32 %v2533, %v2546
        %v2548 = vmul.f32 %v2534, %v2546
        %2550 = vset.pattern.permute.xlu0 0
        %2551 = vperm.xlu0 %2550, %v224
        %v2552 = vpop.permute.xlu0 %2551
        %2555 = vset.pattern.permute.xlu0 0
        %2556 = vperm.xlu0 %2555, %v225
        %v2557 = vpop.permute.xlu0 %2556
        %v2559 = vmul.f32 %v2547, %v2552
        %v2560 = vmul.f32 %v2548, %v2557
        %2562 = vset.pattern.permute.xlu0 0
        %2563 = vperm.xlu0 %2562, %v226
        %v2564 = vpop.permute.xlu0 %2563
        %2567 = vset.pattern.permute.xlu0 0
        %2568 = vperm.xlu0 %2567, %v227
        %v2569 = vpop.permute.xlu0 %2568
        %v2571 = vadd.f32 %v2559, %v2564
        %v2572 = vadd.f32 %v2560, %v2569
        %v2573 = vadd.f32 %v2571, %v228
        %v2574 = vadd.f32 %v2572, %v229
        %2575 = vst [vmem:[%s204] sm:$0xff] %v2573
        %2576 = vst [vmem:[%s204 + $0x8] sm:$0xff] %v2574
        %s2577 = sand.u32 %s129, 1
        %s2578 = scalar_lea.sflag [#allocation3], %s2577
        %s2579 = sand.u32 %s129, 1
        %s2580 = smul.addr %s2579, 16
        %s2581 = scalar_lea.vmem [#allocation2], %s2580
        // Predicated region
        $region37: #{tpu_custom_call.1} parent=35 // pred_check
          %p2582 = pneg %p139
        $region38: #{tpu_custom_call.1} parent=35 // pred_check_branch
          %2584 = sbr.rel (%p2582) target = $region40
        $region39: #{tpu_custom_call.1} parent=35 // pred_region
          %s2586 = ssub.s32 256, 256
          %2587 = vsyncadd %s2578, %s2586
          %s2588 = smul.addr %s22, 2
          %s2589 = sadd.s32 %s23, %s2588
          %s2590 = smul.addr %s2589, 128
          %s2591 = scalar_lea.hbm %s4, %s2590
          %s2592 = sshll.u32 %s2581, 4
          %s2593 = int_to_ptr.vmem [resolvable:$true] %s2592
          %2598 = dma.vmem_to_hbm [thread:$0]  %s2593, 256, %s2591, %s2578, 128, 128, 8
        $region40: #{tpu_custom_call.1} parent=35 // pred_fallthru
          _
      $region36: #{tpu_custom_call.1} parent=5 // pred_fallthru
        _
      %p2599 = scmp.le.s32.totalorder 2, %s13
      // Predicated region
      $region41: #{tpu_custom_call.1} parent=5 // pred_check
        %p2600 = pneg %p2599
      $region42: #{tpu_custom_call.1} parent=5 // pred_check_branch
        %2602 = sbr.rel (%p2600) target = $region44
      $region43: #{tpu_custom_call.1} parent=5 // pred_region
        %s2603 = ssub.s32 %s13, 2
        // Predicated region
        $region45: #{tpu_custom_call.1} parent=43 // pred_check
          %p2604 = pneg %p145
        $region46: #{tpu_custom_call.1} parent=43 // pred_check_branch
          %2606 = sbr.rel (%p2604) target = $region48
        $region47: #{tpu_custom_call.1} parent=43 // pred_region
          %s2607 = sand.u32 %s130, 1
          %s2608 = scalar_lea.sflag [#allocation3], %s2607
          %s2609 = sand.u32 %s130, 1
          %s2610 = smul.addr %s2609, 16
          %s2611 = scalar_lea.vmem [#allocation2], %s2610
          %2612 = dma.done %s2608, 256
        $region48: #{tpu_custom_call.1} parent=43 // pred_fallthru
          _
      $region44: #{tpu_custom_call.1} parent=5 // pred_fallthru
        _
    $region6: #{tpu_custom_call.1} parent=1 // loop_footer
      %s17 = sadd.s32 1, %s13
    $region7: #{tpu_custom_call.1} parent=1 // loop_footer_branch
      %12 = sbr.rel target = $region3
    $region8: #{tpu_custom_call.1} parent=1 // loop_exit
      _
    %2613 = vsyncpa [#allocation3], 1
    %s2614 = scalar_lea.sflag [#allocation3], 1
    %2615 = vsyncpa %s2614, 1

</llo_original>
